<compile_context>
chip_gen: v6e
topology: v6e:2x2x1
jax: 0.10.0
libtpu: 0.0.40
codegen_flags: <defaults>
</compile_context>

<pallas_src>
import functools

import numpy as np
import jax
import jax.numpy as jnp
from jax.experimental import pallas as pl
from jax.experimental.pallas import tpu as pltpu

NOUT = 7          # logits width of the module
NOUT_PAD = 128    # lane-dense padded output width


# ----------------------------- Pallas kernel ------------------------------------

def group_model_kernel(x_ref, wb_ref, mf_ref, out_ref, *, chunk):
    # x_ref  : (TB, Kp)      bf16  raw input rows + ones column (bias) + zero pad
    # wb_ref : (Kp, hid*L)   bf16  banded Conv1d(k=3,p=1) weights, bias row folded in
    # mf_ref : (hid*L, 128)  bf16  fused AdaptiveAvgPool1d(7)+Linear, zero-padded lanes
    # out_ref: (TB, 128)     f32   columns [0:7] are the logits
    x = x_ref[...]
    n = wb_ref.shape[1]
    acc = jnp.zeros((x.shape[0], out_ref.shape[1]), jnp.float32)
    for c in range(n // chunk):                       # static, fully unrolled
        lo = c * chunk
        y = jnp.dot(x, wb_ref[:, lo:lo + chunk],
                    preferred_element_type=jnp.float32)        # conv + bias (MXU, f32 acc)
        y = jnp.maximum(y, 0.0).astype(jnp.bfloat16)           # ReLU, bf16 for next MXU pass
        acc = acc + jnp.dot(y, mf_ref[lo:lo + chunk, :],
                            preferred_element_type=jnp.float32)
    out_ref[...] = acc


# ----------------------------- weight preprocessing -----------------------------

def _round_up(a, b):
    return -(-a // b) * b


def adaptive_avg_pool_matrix(L, out_size=NOUT):
    """PT[l, p] = 1/window if l is inside adaptive window p (PyTorch floor/ceil rule)."""
    pt = np.zeros((L, out_size), dtype=np.float32)
    for p in range(out_size):
        start = (p * L) // out_size
        end = -(-((p + 1) * L) // out_size)  # ceil
        pt[start:end, p] = 1.0 / (end - start)
    return jnp.asarray(pt)


def _band_selector(L):
    """S[m, k, l] = 1 iff input position m feeds tap k of conv output position l
    (zero padding=1 absorbed: out-of-range taps have no selector entry)."""
    S = np.zeros((L, 3, L), dtype=np.float32)
    for l in range(L):
        for k in range(3):
            m = l + k - 1
            if 0 <= m < L:
                S[m, k, l] = 1.0
    return jnp.asarray(S)


def build_kernel_weights(conv_w, conv_b, lin_w, L):
    """Precompute the two resident bf16 matrices used by the kernel."""
    hid_c = conv_w.shape[0]
    wc = conv_w[:, 0, :]                                            # (hid, 3)

    # Conv1d(k=3, pad=1) as banded matmul: wb[m, h*L + l] = wc[h, m - l + 1] (if valid)
    S = _band_selector(L)                                           # (L, 3, L)
    wb = jnp.einsum('mkl,hk->mhl', S, wc).reshape(L, hid_c * L)     # (L, hid*L)

    # Fold the conv bias in as an extra K row (paired with a ones column in x),
    # and zero-pad K up to a multiple of 16 (bf16 sublane packing).
    kp = _round_up(L + 1, 16)
    brow = jnp.repeat(conv_b, L)                                    # (hid*L,)
    wb_ext = jnp.zeros((kp, hid_c * L), jnp.float32)
    wb_ext = wb_ext.at[:L, :].set(wb).at[L, :].set(brow)

    # Fused AdaptiveAvgPool1d(7) + Linear: mf[h*L + l, j] = sum_p PT[l,p] * lin_w[j, h*7 + p]
    pt = adaptive_avg_pool_matrix(L, NOUT)                          # (L, 7)
    lw = lin_w.reshape(NOUT, hid_c, NOUT)                           # (j, h, p)
    mf = jnp.einsum('lp,jhp->hlj', pt, lw).reshape(hid_c * L, NOUT)  # (hid*L, 7)
    mf_pad = jnp.zeros((hid_c * L, NOUT_PAD), jnp.float32).at[:, :NOUT].set(mf)

    return wb_ext.astype(jnp.bfloat16), mf_pad.astype(jnp.bfloat16), kp


# ----------------------------- wrapper ------------------------------------------

def group_model_forward(x, conv_w, conv_b, lin_w, tb=256):
    """x: (B, 1, L) float32 -> logits (B, 1, 7) float32 (matches PyTorch forward)."""
    B, C, L = x.shape
    assert C == 1, "Conv1d in the module has in_channels=1"
    hid_c = conv_w.shape[0]

    wb, mf, kp = build_kernel_weights(conv_w, conv_b, lin_w, L)
    n = hid_c * L
    chunk = next((c for c in (512, 256, 128) if n % c == 0), n)

    # Batch tile: default 256 (fills the 256-wide v6e/v7x MXU), clamped for tiny batches.
    tb_eff = min(tb, _round_up(B, 128))
    b_pad = _round_up(B, tb_eff)
    nb = b_pad // tb_eff

    # Input rows + constant-ones column at index L (activates the bias row of Wb),
    # zero-padded to (b_pad, kp).  Padded batch rows are all-zero -> zero output, sliced off.
    x2 = jnp.zeros((b_pad, kp), jnp.float32)
    x2 = x2.at[:B, :L].set(x[:, 0, :]).at[:B, L].set(1.0)
    x2 = x2.astype(jnp.bfloat16)

    flops = 2 * b_pad * (kp * n + n * NOUT_PAD)
    bytes_accessed = (b_pad * kp * 2 + kp * n * 2 + n * NOUT_PAD * 2
                      + b_pad * NOUT_PAD * 4)

    out = pl.pallas_call(
        functools.partial(group_model_kernel, chunk=chunk),
        out_shape=jax.ShapeDtypeStruct((b_pad, NOUT_PAD), jnp.float32),
        grid=(nb,),
        in_specs=[
            pl.BlockSpec((tb_eff, kp), lambda b: (b, 0)),      # batch tile of raw input (+bias col)
            pl.BlockSpec((kp, n), lambda b: (0, 0)),           # banded conv weight (resident)
            pl.BlockSpec((n, NOUT_PAD), lambda b: (0, 0)),     # fused pool+linear (resident)
        ],
        out_specs=pl.BlockSpec((tb_eff, NOUT_PAD), lambda b: (b, 0)),
        compiler_params=pltpu.CompilerParams(
            dimension_semantics=("parallel",)),
        cost_estimate=pl.CostEstimate(
            flops=flops, transcendentals=0, bytes_accessed=bytes_accessed),
    )(x2, wb, mf)

    return out[:B, None, :NOUT]                                # (B, 1, 7) == logits.unsqueeze(1)


# ----------------------------- init + reference ---------------------------------

def init_params(key, hid_c):
    """Deterministic kaiming-normal (fan_out, relu) style init, zero conv bias."""
    k1, k2 = jax.random.split(key)
    fan_out_conv = hid_c * 3                  # out_channels * kernel_size
    conv_w = jax.random.normal(k1, (hid_c, 1, 3), jnp.float32) * np.sqrt(2.0 / fan_out_conv)
    conv_b = jnp.zeros((hid_c,), jnp.float32)
    fan_out_lin = NOUT                        # out_features
    lin_w = jax.random.normal(k2, (NOUT, hid_c * NOUT), jnp.float32) * np.sqrt(2.0 / fan_out_lin)
    return conv_w, conv_b, lin_w


def reference_forward(x, conv_w, conv_b, lin_w, pool_mat):
    """Plain-JAX f32 reference matching the PyTorch forward."""
    B, _, L = x.shape
    xpad = jnp.pad(x[:, 0, :], ((0, 0), (1, 1)))
    xs = jnp.stack([xpad[:, 0:L], xpad[:, 1:L + 1], xpad[:, 2:L + 2]], axis=1)  # (B,3,L)
    y = jnp.einsum('hk,bkl->bhl', conv_w[:, 0, :], xs) + conv_b[None, :, None]
    y = jnp.maximum(y, 0.0)
    pooled = jnp.einsum('bhl,lp->bhp', y, pool_mat)      # (B, hid, 7)
    flat = pooled.reshape(B, -1)                         # row-major h*7 + p
    logits = flat @ lin_w.T
    return logits[:, None, :]


# ----------------------------- demo / test --------------------------------------

if __name__ == "__main__":
    L, hid_c = 56, 32
    key = jax.random.PRNGKey(0)
    kx, kp_, kx2 = jax.random.split(key, 3)
    conv_w, conv_b, lin_w = init_params(kp_, hid_c)
    pool_mat = adaptive_avg_pool_matrix(L, NOUT)

    # Small primary example (batch=2): one grid step, batch-padding path exercised.
    B = 2
    x = jax.random.normal(kx, (B, 1, L), jnp.float32)
    out = jax.block_until_ready(group_model_forward(x, conv_w, conv_b, lin_w))
    assert out.shape == (B, 1, NOUT), out.shape
    ref = reference_forward(x, conv_w, conv_b, lin_w, pool_mat)
    # bf16 MXU operands -> loosened tolerance vs the f32 reference (deliberate).
    np.testing.assert_allclose(np.asarray(out), np.asarray(ref), rtol=5e-2, atol=5e-2)

    # Larger batch: two parallel grid steps (even -> balances v7x's two TensorCores) + padding.
    B2 = 300
    xb = jax.random.normal(kx2, (B2, 1, L), jnp.float32)
    out2 = jax.block_until_ready(group_model_forward(xb, conv_w, conv_b, lin_w))
    ref2 = reference_forward(xb, conv_w, conv_b, lin_w, pool_mat)
    np.testing.assert_allclose(np.asarray(out2), np.asarray(ref2), rtol=5e-2, atol=5e-2)

    print("KERNEL_OK")
</pallas_src>

<mosaic_0001>
module attributes {stable_mosaic.version = 11 : i64} {
  func.func @group_model_kernel(%arg0: i32, %arg1: memref<128x64xbf16, #tpu.memory_space<vmem>>, %arg2: memref<64x1792xbf16, #tpu.memory_space<vmem>>, %arg3: memref<1792x128xbf16, #tpu.memory_space<vmem>>, %arg4: memref<128x128xf32, #tpu.memory_space<vmem>>) attributes {dimension_semantics = [#tpu.dimension_semantics<parallel>], iteration_bounds = array<i64: 1>, scalar_prefetch = 0 : i64, scratch_operands = 0 : i64, tpu.core_type = #tpu.core_type<tc>, window_params = [{transform_indices = @transform_0, window_bounds = array<i64: 128, 64>}, {pipeline_mode = #tpu.pipeline_mode<synchronous>, transform_indices = @transform_1, window_bounds = array<i64: 64, 1792>}, {pipeline_mode = #tpu.pipeline_mode<synchronous>, transform_indices = @transform_2, window_bounds = array<i64: 1792, 128>}, {transform_indices = @transform_3, window_bounds = array<i64: 128, 128>}]} {
    %c0 = arith.constant 0 : index
    %c0_0 = arith.constant 0 : index
    %0 = vector.load %arg1[%c0, %c0_0] : memref<128x64xbf16, #tpu.memory_space<vmem>>, vector<128x64xbf16>
    %cst = arith.constant 0.000000e+00 : f32
    %1 = vector.broadcast %cst : f32 to vector<128x128xf32>
    %c0_1 = arith.constant 0 : index
    %c0_2 = arith.constant 0 : index
    %2 = vector.load %arg2[%c0_1, %c0_2] : memref<64x1792xbf16, #tpu.memory_space<vmem>>, vector<64x256xbf16>
    %cst_3 = arith.constant dense<0.000000e+00> : vector<128x256xf32>
    %3 = tpu.matmul %0, %2, %cst_3 {dimension_numbers = #tpu.dot_dimension_numbers<[1], [0], [0], [1], [0, 0, 1, 1], [], []>} : vector<128x64xbf16>, vector<64x256xbf16>, vector<128x256xf32> -> vector<128x256xf32>
    %cst_4 = arith.constant 0.000000e+00 : f32
    %4 = vector.broadcast %cst_4 : f32 to vector<128x256xf32>
    %5 = arith.maximumf %3, %4 : vector<128x256xf32>
    %6 = arith.truncf %5 : vector<128x256xf32> to vector<128x256xbf16>
    %c0_5 = arith.constant 0 : index
    %c0_6 = arith.constant 0 : index
    %7 = vector.load %arg3[%c0_5, %c0_6] : memref<1792x128xbf16, #tpu.memory_space<vmem>>, vector<256x128xbf16>
    %cst_7 = arith.constant dense<0.000000e+00> : vector<128x128xf32>
    %8 = tpu.matmul %6, %7, %cst_7 {dimension_numbers = #tpu.dot_dimension_numbers<[1], [0], [0], [1], [0, 0, 1, 1], [], []>} : vector<128x256xbf16>, vector<256x128xbf16>, vector<128x128xf32> -> vector<128x128xf32>
    %9 = arith.addf %1, %8 : vector<128x128xf32>
    %c0_8 = arith.constant 0 : index
    %c256 = arith.constant 256 : index
    %10 = vector.load %arg2[%c0_8, %c256] : memref<64x1792xbf16, #tpu.memory_space<vmem>>, vector<64x256xbf16>
    %cst_9 = arith.constant dense<0.000000e+00> : vector<128x256xf32>
    %11 = tpu.matmul %0, %10, %cst_9 {dimension_numbers = #tpu.dot_dimension_numbers<[1], [0], [0], [1], [0, 0, 1, 1], [], []>} : vector<128x64xbf16>, vector<64x256xbf16>, vector<128x256xf32> -> vector<128x256xf32>
    %cst_10 = arith.constant 0.000000e+00 : f32
    %12 = vector.broadcast %cst_10 : f32 to vector<128x256xf32>
    %13 = arith.maximumf %11, %12 : vector<128x256xf32>
    %14 = arith.truncf %13 : vector<128x256xf32> to vector<128x256xbf16>
    %c256_11 = arith.constant 256 : index
    %c0_12 = arith.constant 0 : index
    %15 = vector.load %arg3[%c256_11, %c0_12] : memref<1792x128xbf16, #tpu.memory_space<vmem>>, vector<256x128xbf16>
    %cst_13 = arith.constant dense<0.000000e+00> : vector<128x128xf32>
    %16 = tpu.matmul %14, %15, %cst_13 {dimension_numbers = #tpu.dot_dimension_numbers<[1], [0], [0], [1], [0, 0, 1, 1], [], []>} : vector<128x256xbf16>, vector<256x128xbf16>, vector<128x128xf32> -> vector<128x128xf32>
    %17 = arith.addf %9, %16 : vector<128x128xf32>
    %c0_14 = arith.constant 0 : index
    %c512 = arith.constant 512 : index
    %18 = vector.load %arg2[%c0_14, %c512] : memref<64x1792xbf16, #tpu.memory_space<vmem>>, vector<64x256xbf16>
    %cst_15 = arith.constant dense<0.000000e+00> : vector<128x256xf32>
    %19 = tpu.matmul %0, %18, %cst_15 {dimension_numbers = #tpu.dot_dimension_numbers<[1], [0], [0], [1], [0, 0, 1, 1], [], []>} : vector<128x64xbf16>, vector<64x256xbf16>, vector<128x256xf32> -> vector<128x256xf32>
    %cst_16 = arith.constant 0.000000e+00 : f32
    %20 = vector.broadcast %cst_16 : f32 to vector<128x256xf32>
    %21 = arith.maximumf %19, %20 : vector<128x256xf32>
    %22 = arith.truncf %21 : vector<128x256xf32> to vector<128x256xbf16>
    %c512_17 = arith.constant 512 : index
    %c0_18 = arith.constant 0 : index
    %23 = vector.load %arg3[%c512_17, %c0_18] : memref<1792x128xbf16, #tpu.memory_space<vmem>>, vector<256x128xbf16>
    %cst_19 = arith.constant dense<0.000000e+00> : vector<128x128xf32>
    %24 = tpu.matmul %22, %23, %cst_19 {dimension_numbers = #tpu.dot_dimension_numbers<[1], [0], [0], [1], [0, 0, 1, 1], [], []>} : vector<128x256xbf16>, vector<256x128xbf16>, vector<128x128xf32> -> vector<128x128xf32>
    %25 = arith.addf %17, %24 : vector<128x128xf32>
    %c0_20 = arith.constant 0 : index
    %c768 = arith.constant 768 : index
    %26 = vector.load %arg2[%c0_20, %c768] : memref<64x1792xbf16, #tpu.memory_space<vmem>>, vector<64x256xbf16>
    %cst_21 = arith.constant dense<0.000000e+00> : vector<128x256xf32>
    %27 = tpu.matmul %0, %26, %cst_21 {dimension_numbers = #tpu.dot_dimension_numbers<[1], [0], [0], [1], [0, 0, 1, 1], [], []>} : vector<128x64xbf16>, vector<64x256xbf16>, vector<128x256xf32> -> vector<128x256xf32>
    %cst_22 = arith.constant 0.000000e+00 : f32
    %28 = vector.broadcast %cst_22 : f32 to vector<128x256xf32>
    %29 = arith.maximumf %27, %28 : vector<128x256xf32>
    %30 = arith.truncf %29 : vector<128x256xf32> to vector<128x256xbf16>
    %c768_23 = arith.constant 768 : index
    %c0_24 = arith.constant 0 : index
    %31 = vector.load %arg3[%c768_23, %c0_24] : memref<1792x128xbf16, #tpu.memory_space<vmem>>, vector<256x128xbf16>
    %cst_25 = arith.constant dense<0.000000e+00> : vector<128x128xf32>
    %32 = tpu.matmul %30, %31, %cst_25 {dimension_numbers = #tpu.dot_dimension_numbers<[1], [0], [0], [1], [0, 0, 1, 1], [], []>} : vector<128x256xbf16>, vector<256x128xbf16>, vector<128x128xf32> -> vector<128x128xf32>
    %33 = arith.addf %25, %32 : vector<128x128xf32>
    %c0_26 = arith.constant 0 : index
    %c1024 = arith.constant 1024 : index
    %34 = vector.load %arg2[%c0_26, %c1024] : memref<64x1792xbf16, #tpu.memory_space<vmem>>, vector<64x256xbf16>
    %cst_27 = arith.constant dense<0.000000e+00> : vector<128x256xf32>
    %35 = tpu.matmul %0, %34, %cst_27 {dimension_numbers = #tpu.dot_dimension_numbers<[1], [0], [0], [1], [0, 0, 1, 1], [], []>} : vector<128x64xbf16>, vector<64x256xbf16>, vector<128x256xf32> -> vector<128x256xf32>
    %cst_28 = arith.constant 0.000000e+00 : f32
    %36 = vector.broadcast %cst_28 : f32 to vector<128x256xf32>
    %37 = arith.maximumf %35, %36 : vector<128x256xf32>
    %38 = arith.truncf %37 : vector<128x256xf32> to vector<128x256xbf16>
    %c1024_29 = arith.constant 1024 : index
    %c0_30 = arith.constant 0 : index
    %39 = vector.load %arg3[%c1024_29, %c0_30] : memref<1792x128xbf16, #tpu.memory_space<vmem>>, vector<256x128xbf16>
    %cst_31 = arith.constant dense<0.000000e+00> : vector<128x128xf32>
    %40 = tpu.matmul %38, %39, %cst_31 {dimension_numbers = #tpu.dot_dimension_numbers<[1], [0], [0], [1], [0, 0, 1, 1], [], []>} : vector<128x256xbf16>, vector<256x128xbf16>, vector<128x128xf32> -> vector<128x128xf32>
    %41 = arith.addf %33, %40 : vector<128x128xf32>
    %c0_32 = arith.constant 0 : index
    %c1280 = arith.constant 1280 : index
    %42 = vector.load %arg2[%c0_32, %c1280] : memref<64x1792xbf16, #tpu.memory_space<vmem>>, vector<64x256xbf16>
    %cst_33 = arith.constant dense<0.000000e+00> : vector<128x256xf32>
    %43 = tpu.matmul %0, %42, %cst_33 {dimension_numbers = #tpu.dot_dimension_numbers<[1], [0], [0], [1], [0, 0, 1, 1], [], []>} : vector<128x64xbf16>, vector<64x256xbf16>, vector<128x256xf32> -> vector<128x256xf32>
    %cst_34 = arith.constant 0.000000e+00 : f32
    %44 = vector.broadcast %cst_34 : f32 to vector<128x256xf32>
    %45 = arith.maximumf %43, %44 : vector<128x256xf32>
    %46 = arith.truncf %45 : vector<128x256xf32> to vector<128x256xbf16>
    %c1280_35 = arith.constant 1280 : index
    %c0_36 = arith.constant 0 : index
    %47 = vector.load %arg3[%c1280_35, %c0_36] : memref<1792x128xbf16, #tpu.memory_space<vmem>>, vector<256x128xbf16>
    %cst_37 = arith.constant dense<0.000000e+00> : vector<128x128xf32>
    %48 = tpu.matmul %46, %47, %cst_37 {dimension_numbers = #tpu.dot_dimension_numbers<[1], [0], [0], [1], [0, 0, 1, 1], [], []>} : vector<128x256xbf16>, vector<256x128xbf16>, vector<128x128xf32> -> vector<128x128xf32>
    %49 = arith.addf %41, %48 : vector<128x128xf32>
    %c0_38 = arith.constant 0 : index
    %c1536 = arith.constant 1536 : index
    %50 = vector.load %arg2[%c0_38, %c1536] : memref<64x1792xbf16, #tpu.memory_space<vmem>>, vector<64x256xbf16>
    %cst_39 = arith.constant dense<0.000000e+00> : vector<128x256xf32>
    %51 = tpu.matmul %0, %50, %cst_39 {dimension_numbers = #tpu.dot_dimension_numbers<[1], [0], [0], [1], [0, 0, 1, 1], [], []>} : vector<128x64xbf16>, vector<64x256xbf16>, vector<128x256xf32> -> vector<128x256xf32>
    %cst_40 = arith.constant 0.000000e+00 : f32
    %52 = vector.broadcast %cst_40 : f32 to vector<128x256xf32>
    %53 = arith.maximumf %51, %52 : vector<128x256xf32>
    %54 = arith.truncf %53 : vector<128x256xf32> to vector<128x256xbf16>
    %c1536_41 = arith.constant 1536 : index
    %c0_42 = arith.constant 0 : index
    %55 = vector.load %arg3[%c1536_41, %c0_42] : memref<1792x128xbf16, #tpu.memory_space<vmem>>, vector<256x128xbf16>
    %cst_43 = arith.constant dense<0.000000e+00> : vector<128x128xf32>
    %56 = tpu.matmul %54, %55, %cst_43 {dimension_numbers = #tpu.dot_dimension_numbers<[1], [0], [0], [1], [0, 0, 1, 1], [], []>} : vector<128x256xbf16>, vector<256x128xbf16>, vector<128x128xf32> -> vector<128x128xf32>
    %57 = arith.addf %49, %56 : vector<128x128xf32>
    %c0_44 = arith.constant 0 : index
    %c0_45 = arith.constant 0 : index
    %58 = vector.load %arg4[%c0_44, %c0_45] : memref<128x128xf32, #tpu.memory_space<vmem>>, vector<128x128xf32>
    tpu.vector_store %arg4[%c0_44, %c0_45], %57 {strides = array<i32>} : memref<128x128xf32, #tpu.memory_space<vmem>>, vector<128x128xf32>,
    return
  }
  func.func @transform_0(%arg0: i32) -> (i32, i32) {
    %c0_i32 = arith.constant 0 : i32
    %c0_i32_0 = arith.constant 0 : i32
    return %arg0, %c0_i32 : i32, i32
  }
  func.func @transform_1(%arg0: i32) -> (i32, i32) {
    %c0_i32 = arith.constant 0 : i32
    %c0_i32_0 = arith.constant 0 : i32
    %c0_i32_1 = arith.constant 0 : i32
    return %c0_i32, %c0_i32_0 : i32, i32
  }
  func.func @transform_2(%arg0: i32) -> (i32, i32) {
    %c0_i32 = arith.constant 0 : i32
    %c0_i32_0 = arith.constant 0 : i32
    %c0_i32_1 = arith.constant 0 : i32
    return %c0_i32, %c0_i32_0 : i32, i32
  }
  func.func @transform_3(%arg0: i32) -> (i32, i32) {
    %c0_i32 = arith.constant 0 : i32
    %c0_i32_0 = arith.constant 0 : i32
    return %arg0, %c0_i32 : i32, i32
  }
}

</mosaic_0001>

<llo_original>
// kernel: tpu_custom_call.1
$region0: #{tpu_custom_call.1}
  #allocation0 [shape = 'u32[]', space=smem, size = 0x4, offset = 0x4, fixed_abs, tag = 'smem constant byte address 0x4 - core index']
  #allocation1 [shape = 'u32[144,128]{1,0:T(1,128)}', space=vmem, size = 0x12000, scoped, tag = 'internal scratch']
  %s0 = inlined_call_operand.vmem [shape: bf16[128,64], index: 0, kind: input, shape index: {}]
  %s1 = inlined_call_operand.hbm [shape: bf16[64,1792], index: 1, kind: input, shape index: {}]
  %s2 = inlined_call_operand.hbm [shape: bf16[1792,128], index: 2, kind: input, shape index: {}]
  %s3 = inlined_call_operand.hbm [shape: f32[128,128], index: 3, kind: output, shape index: {}]
  %s4 = sld [smem:[#allocation0]]
  $region30: #{tpu_custom_call.1} parent=0
    _
  %s6 = ssub.s32 1, %s4
  %s7 = scalar_select 0, %s6, %s4
  $region1: #{tpu_custom_call.1} parent=0
    #allocation2 [shape = 'u8[229376]{0}', space=vmem, size = 0x38000, scoped, tag = 'input window, operand 1, single buffered']
    #allocation3 [shape = 's32[1]{0}', space=sflag, size = 0x4, scoped, tag = 'scoped memory for tpu_custom_call.1']
    #allocation4 [shape = 's32[1]{0}', space=sflag, size = 0x4, scoped, tag = 'scoped memory for tpu_custom_call.1']
    #allocation5 [shape = 'u8[458752]{0}', space=vmem, size = 0x70000, scoped, tag = 'input window, operand 2, single buffered']
    #allocation6 [shape = 's32[1]{0}', space=sflag, size = 0x4, scoped, tag = 'scoped memory for tpu_custom_call.1']
    #allocation7 [shape = 'u8[65536]{0}', space=vmem, size = 0x10000, scoped, tag = 'output window, operand 0, single buffered']
    %8 = vsyncpa [#allocation3], 0
    %9 = vsyncpa [#allocation6], 0
    %10 = vsyncpa [#allocation4], 0
    // Predicated region
    $region2: #{tpu_custom_call.1} parent=1 // pred_check
      _
    $region3: #{tpu_custom_call.1} parent=1 // pred_check_branch
      %12 = sbr.rel (0) target = $region5
    $region4: #{tpu_custom_call.1} parent=1 // pred_region
      _
    $region5: #{tpu_custom_call.1} parent=1 // pred_fallthru
      _
    // Predicated region
    $region6: #{tpu_custom_call.1} parent=1 // pred_check
      _
    $region7: #{tpu_custom_call.1} parent=1 // pred_check_branch
      %14 = sbr.rel (0) target = $region9
    $region8: #{tpu_custom_call.1} parent=1 // pred_region
      %s16 = ssub.s32 7168, 7168
      %17 = vsyncadd [#allocation3], %s16
      %s18 = sshll.u32 [#allocation2], 4
      %s19 = int_to_ptr.vmem [resolvable:$true] %s18
      %24 = dma.hbm_to_vmem [thread:$0]  %s1, 7168, %s19, [#allocation3], 896, 896, 56
    $region9: #{tpu_custom_call.1} parent=1 // pred_fallthru
      _
    // Predicated region
    $region10: #{tpu_custom_call.1} parent=1 // pred_check
      _
    $region11: #{tpu_custom_call.1} parent=1 // pred_check_branch
      %26 = sbr.rel (0) target = $region13
    $region12: #{tpu_custom_call.1} parent=1 // pred_region
      %s28 = ssub.s32 14336, 14336
      %29 = vsyncadd [#allocation6], %s28
      %s30 = sshll.u32 [#allocation5], 4
      %s31 = int_to_ptr.vmem [resolvable:$true] %s30
      %36 = dma.hbm_to_vmem [thread:$0]  %s2, 14336, %s31, [#allocation6], 64, 64, 4
    $region13: #{tpu_custom_call.1} parent=1 // pred_fallthru
      _
    // Predicated region
    $region14: #{tpu_custom_call.1} parent=1 // pred_check
      _
    $region15: #{tpu_custom_call.1} parent=1 // pred_check_branch
      %38 = sbr.rel (0) target = $region17
    $region16: #{tpu_custom_call.1} parent=1 // pred_region
      %39 = dma.done [#allocation3], 7168
    $region17: #{tpu_custom_call.1} parent=1 // pred_fallthru
      _
    // Predicated region
    $region18: #{tpu_custom_call.1} parent=1 // pred_check
      _
    $region19: #{tpu_custom_call.1} parent=1 // pred_check_branch
      %41 = sbr.rel (0) target = $region21
    $region20: #{tpu_custom_call.1} parent=1 // pred_region
      %42 = dma.done [#allocation6], 14336
    $region21: #{tpu_custom_call.1} parent=1 // pred_fallthru
      _
    %v44 = vld [vmem:[%s0] sm:$0xf]
    %v45 = vld [vmem:[%s0 + $0x4] sm:$0xf]
    %v46 = vld [vmem:[%s0 + $0x8] sm:$0xf]
    %v47 = vld [vmem:[%s0 + $0xc] sm:$0xf]
    %v48 = vld [vmem:[%s0 + $0x10] sm:$0xf]
    %v49 = vld [vmem:[%s0 + $0x14] sm:$0xf]
    %v50 = vld [vmem:[%s0 + $0x18] sm:$0xf]
    %v51 = vld [vmem:[%s0 + $0x1c] sm:$0xf]
    %v52 = vld [vmem:[%s0 + $0x20] sm:$0xf]
    %v53 = vld [vmem:[%s0 + $0x24] sm:$0xf]
    %v54 = vld [vmem:[%s0 + $0x28] sm:$0xf]
    %v55 = vld [vmem:[%s0 + $0x2c] sm:$0xf]
    %v56 = vld [vmem:[%s0 + $0x30] sm:$0xf]
    %v57 = vld [vmem:[%s0 + $0x34] sm:$0xf]
    %v58 = vld [vmem:[%s0 + $0x38] sm:$0xf]
    %v59 = vld [vmem:[%s0 + $0x3c] sm:$0xf]
    %v60 = vld [vmem:[#allocation2] sm:$0xff]
    %v61 = vld [vmem:[#allocation2 + $0x38] sm:$0xff]
    %v62 = vld [vmem:[#allocation2 + $0x70] sm:$0xff]
    %v63 = vld [vmem:[#allocation2 + $0xa8] sm:$0xff]
    %v64 = vld [vmem:[#allocation2 + $0xe0] sm:$0xff]
    %v65 = vld [vmem:[#allocation2 + $0x118] sm:$0xff]
    %v66 = vld [vmem:[#allocation2 + $0x150] sm:$0xff]
    %v67 = vld [vmem:[#allocation2 + $0x188] sm:$0xff]
    %v84 = vunpack.c.l.b16 %v44
    %v85 = vunpack.c.l.b16 %v45
    %v86 = vunpack.c.l.b16 %v46
    %v87 = vunpack.c.l.b16 %v47
    %v88 = vunpack.c.l.b16 %v48
    %v89 = vunpack.c.l.b16 %v49
    %v90 = vunpack.c.l.b16 %v50
    %v91 = vunpack.c.l.b16 %v51
    %v92 = vunpack.c.l.b16 %v52
    %v93 = vunpack.c.l.b16 %v53
    %v94 = vunpack.c.l.b16 %v54
    %v95 = vunpack.c.l.b16 %v55
    %v96 = vunpack.c.l.b16 %v56
    %v97 = vunpack.c.l.b16 %v57
    %v98 = vunpack.c.l.b16 %v58
    %v99 = vunpack.c.l.b16 %v59
    %v100 = vpack.c.b16 %v85, %v84
    %v101 = vpack.c.b16 %v87, %v86
    %v102 = vpack.c.b16 %v89, %v88
    %v103 = vpack.c.b16 %v91, %v90
    %v104 = vpack.c.b16 %v93, %v92
    %v105 = vpack.c.b16 %v95, %v94
    %v106 = vpack.c.b16 %v97, %v96
    %v107 = vpack.c.b16 %v99, %v98
    %v116 = vunpack.c.l.b16 %v60
    %v117 = vunpack.c.h.b16 %v60
    %v118 = vunpack.c.l.b16 %v61
    %v119 = vunpack.c.h.b16 %v61
    %v120 = vunpack.c.l.b16 %v62
    %v121 = vunpack.c.h.b16 %v62
    %v122 = vunpack.c.l.b16 %v63
    %v123 = vunpack.c.h.b16 %v63
    %v124 = vunpack.c.l.b16 %v64
    %v125 = vunpack.c.h.b16 %v64
    %v126 = vunpack.c.l.b16 %v65
    %v127 = vunpack.c.h.b16 %v65
    %v128 = vunpack.c.l.b16 %v66
    %v129 = vunpack.c.h.b16 %v66
    %v130 = vunpack.c.l.b16 %v67
    %v131 = vunpack.c.h.b16 %v67
    %v132 = vpack.c.b16 %v118, %v116
    %v133 = vpack.c.b16 %v119, %v117
    %v134 = vpack.c.b16 %v122, %v120
    %v135 = vpack.c.b16 %v123, %v121
    %v136 = vpack.c.b16 %v126, %v124
    %v137 = vpack.c.b16 %v127, %v125
    %v138 = vpack.c.b16 %v130, %v128
    %v139 = vpack.c.b16 %v131, %v129
    %vm148 = vcmask 523264
    %v150 = vsel %vm148, %v100, 0
    %v153 = vsel %vm148, %v101, 0
    %v156 = vsel %vm148, %v102, 0
    %v159 = vsel %vm148, %v103, 0
    %v162 = vsel %vm148, %v104, 0
    %v165 = vsel %vm148, %v105, 0
    %v168 = vsel %vm148, %v106, 0
    %v171 = vsel %vm148, %v107, 0
    %173 = vmatprep.subr.bf16.mxu0 0
    %174 = vmatpush1.bf16.msra.mxu0 0
    %175 = vmatprep.subr.bf16.mxu0 0
    %176 = vmatpush1.bf16.msra.mxu0 0
    %177 = vmatprep.subr.bf16.mxu0 0
    %178 = vmatpush1.bf16.msra.mxu0 0
    %179 = vmatprep.subr.bf16.mxu0 0
    %180 = vmatpush1.bf16.msra.mxu0 0
    %181 = vmatprep.subr.bf16.mxu0 %v139
    %182 = vmatpush1.bf16.msra.mxu0 %v138
    %183 = vmatprep.subr.bf16.mxu0 %v137
    %184 = vmatpush1.bf16.msra.mxu0 %v136
    %185 = vmatprep.subr.bf16.mxu0 %v135
    %186 = vmatpush1.bf16.msra.mxu0 %v134
    %187 = vmatprep.subr.bf16.mxu0 %v133
    %188 = vmatpush1.bf16.msra.mxu0 %v132
    %189 = vmatprep.subr.bf16.mxu0 0
    %190 = vmatpush2.bf16.msra.mxu0 0
    %191 = vmatprep.subr.bf16.mxu0 0
    %192 = vmatpush2.bf16.msra.mxu0 0
    %193 = vmatprep.subr.bf16.mxu0 0
    %194 = vmatpush2.bf16.msra.mxu0 0
    %195 = vmatprep.subr.bf16.mxu0 0
    %196 = vmatpush2.bf16.msra.mxu0 0
    %197 = vmatprep.subr.bf16.mxu0 0
    %198 = vmatpush2.bf16.msra.mxu0 0
    %199 = vmatprep.subr.bf16.mxu0 0
    %200 = vmatpush2.bf16.msra.mxu0 0
    %201 = vmatprep.subr.bf16.mxu0 0
    %202 = vmatpush2.bf16.msra.mxu0 0
    %203 = vmatprep.subr.bf16.mxu0 0
    %204 = vmatpush2.bf16.msra.mxu0 0
    %205 = vmatprep.mubr.bf16.mxu0 0
    %206 = vmatmul.mubr.bf16.gmra.mxu0 %v150
    %v207 = vpop.f32.mrf.mxu0
    %v208 = vadd.f32 0.0, %v207
    %v209 = vpop.f32.mrf.mxu0
    %v210 = vadd.f32 0.0, %v209
    %v211 = vpop.f32.mrf.mxu0
    %v212 = vadd.f32 0.0, %v211
    %v213 = vpop.f32.mrf.mxu0
    %v214 = vadd.f32 0.0, %v213
    %215 = vmatprep.mubr.bf16.mxu0 0
    %216 = vmatmul.mubr.bf16.gmra.mxu0 %v153
    %v217 = vpop.f32.mrf.mxu0
    %v218 = vadd.f32 0.0, %v217
    %v219 = vpop.f32.mrf.mxu0
    %v220 = vadd.f32 0.0, %v219
    %v221 = vpop.f32.mrf.mxu0
    %v222 = vadd.f32 0.0, %v221
    %v223 = vpop.f32.mrf.mxu0
    %v224 = vadd.f32 0.0, %v223
    %225 = vmatprep.mubr.bf16.mxu0 0
    %226 = vmatmul.mubr.bf16.gmra.mxu0 %v156
    %v227 = vpop.f32.mrf.mxu0
    %v228 = vadd.f32 0.0, %v227
    %v229 = vpop.f32.mrf.mxu0
    %v230 = vadd.f32 0.0, %v229
    %v231 = vpop.f32.mrf.mxu0
    %v232 = vadd.f32 0.0, %v231
    %v233 = vpop.f32.mrf.mxu0
    %v234 = vadd.f32 0.0, %v233
    %235 = vmatprep.mubr.bf16.mxu0 0
    %236 = vmatmul.mubr.bf16.gmra.mxu0 %v159
    %v237 = vpop.f32.mrf.mxu0
    %v238 = vadd.f32 0.0, %v237
    %v239 = vpop.f32.mrf.mxu0
    %v240 = vadd.f32 0.0, %v239
    %v241 = vpop.f32.mrf.mxu0
    %v242 = vadd.f32 0.0, %v241
    %v243 = vpop.f32.mrf.mxu0
    %v244 = vadd.f32 0.0, %v243
    %245 = vmatprep.mubr.bf16.mxu0 0
    %246 = vmatmul.mubr.bf16.gmra.mxu0 %v162
    %v247 = vpop.f32.mrf.mxu0
    %v248 = vadd.f32 0.0, %v247
    %v249 = vpop.f32.mrf.mxu0
    %v250 = vadd.f32 0.0, %v249
    %v251 = vpop.f32.mrf.mxu0
    %v252 = vadd.f32 0.0, %v251
    %v253 = vpop.f32.mrf.mxu0
    %v254 = vadd.f32 0.0, %v253
    %255 = vmatprep.mubr.bf16.mxu0 0
    %256 = vmatmul.mubr.bf16.gmra.mxu0 %v165
    %v257 = vpop.f32.mrf.mxu0
    %v258 = vadd.f32 0.0, %v257
    %v259 = vpop.f32.mrf.mxu0
    %v260 = vadd.f32 0.0, %v259
    %v261 = vpop.f32.mrf.mxu0
    %v262 = vadd.f32 0.0, %v261
    %v263 = vpop.f32.mrf.mxu0
    %v264 = vadd.f32 0.0, %v263
    %265 = vmatprep.mubr.bf16.mxu0 0
    %266 = vmatmul.mubr.bf16.gmra.mxu0 %v168
    %v267 = vpop.f32.mrf.mxu0
    %v268 = vadd.f32 0.0, %v267
    %v269 = vpop.f32.mrf.mxu0
    %v270 = vadd.f32 0.0, %v269
    %v271 = vpop.f32.mrf.mxu0
    %v272 = vadd.f32 0.0, %v271
    %v273 = vpop.f32.mrf.mxu0
    %v274 = vadd.f32 0.0, %v273
    %275 = vmatprep.mubr.bf16.mxu0 0
    %276 = vmatmul.mubr.bf16.gmra.mxu0 %v171
    %v277 = vpop.f32.mrf.mxu0
    %v278 = vadd.f32 0.0, %v277
    %v279 = vpop.f32.mrf.mxu0
    %v280 = vadd.f32 0.0, %v279
    %v281 = vpop.f32.mrf.mxu0
    %v282 = vadd.f32 0.0, %v281
    %v283 = vpop.f32.mrf.mxu0
    %v284 = vadd.f32 0.0, %v283
    %285 = vdwg.mxu0
    %v286 = vmax.f32 %v208, 0.0
    %v287 = vmax.f32 %v210, 0.0
    %v288 = vmax.f32 %v212, 0.0
    %v289 = vmax.f32 %v214, 0.0
    %v290 = vmax.f32 %v218, 0.0
    %v291 = vmax.f32 %v220, 0.0
    %v292 = vmax.f32 %v222, 0.0
    %v293 = vmax.f32 %v224, 0.0
    %v294 = vmax.f32 %v228, 0.0
    %v295 = vmax.f32 %v230, 0.0
    %v296 = vmax.f32 %v232, 0.0
    %v297 = vmax.f32 %v234, 0.0
    %v298 = vmax.f32 %v238, 0.0
    %v299 = vmax.f32 %v240, 0.0
    %v300 = vmax.f32 %v242, 0.0
    %v301 = vmax.f32 %v244, 0.0
    %v302 = vmax.f32 %v248, 0.0
    %v303 = vmax.f32 %v250, 0.0
    %v304 = vmax.f32 %v252, 0.0
    %v305 = vmax.f32 %v254, 0.0
    %v306 = vmax.f32 %v258, 0.0
    %v307 = vmax.f32 %v260, 0.0
    %v308 = vmax.f32 %v262, 0.0
    %v309 = vmax.f32 %v264, 0.0
    %v310 = vmax.f32 %v268, 0.0
    %v311 = vmax.f32 %v270, 0.0
    %v312 = vmax.f32 %v272, 0.0
    %v313 = vmax.f32 %v274, 0.0
    %v314 = vmax.f32 %v278, 0.0
    %v315 = vmax.f32 %v280, 0.0
    %v316 = vmax.f32 %v282, 0.0
    %v317 = vmax.f32 %v284, 0.0
    %v318 = vpack.c.bf16 %v288, %v286
    %v319 = vpack.c.bf16 %v289, %v287
    %v320 = vpack.c.bf16 %v292, %v290
    %v321 = vpack.c.bf16 %v293, %v291
    %v322 = vpack.c.bf16 %v296, %v294
    %v323 = vpack.c.bf16 %v297, %v295
    %v324 = vpack.c.bf16 %v300, %v298
    %v325 = vpack.c.bf16 %v301, %v299
    %v326 = vpack.c.bf16 %v304, %v302
    %v327 = vpack.c.bf16 %v305, %v303
    %v328 = vpack.c.bf16 %v308, %v306
    %v329 = vpack.c.bf16 %v309, %v307
    %v330 = vpack.c.bf16 %v312, %v310
    %v331 = vpack.c.bf16 %v313, %v311
    %v332 = vpack.c.bf16 %v316, %v314
    %v333 = vpack.c.bf16 %v317, %v315
    %v334 = vld [vmem:[#allocation5] sm:$0xf]
    %v335 = vld [vmem:[#allocation5 + $0x4] sm:$0xf]
    %v336 = vld [vmem:[#allocation5 + $0x8] sm:$0xf]
    %v337 = vld [vmem:[#allocation5 + $0xc] sm:$0xf]
    %v338 = vld [vmem:[#allocation5 + $0x10] sm:$0xf]
    %v339 = vld [vmem:[#allocation5 + $0x14] sm:$0xf]
    %v340 = vld [vmem:[#allocation5 + $0x18] sm:$0xf]
    %v341 = vld [vmem:[#allocation5 + $0x1c] sm:$0xf]
    %v342 = vld [vmem:[#allocation5 + $0x20] sm:$0xf]
    %v343 = vld [vmem:[#allocation5 + $0x24] sm:$0xf]
    %v344 = vld [vmem:[#allocation5 + $0x28] sm:$0xf]
    %v345 = vld [vmem:[#allocation5 + $0x2c] sm:$0xf]
    %v346 = vld [vmem:[#allocation5 + $0x30] sm:$0xf]
    %v347 = vld [vmem:[#allocation5 + $0x34] sm:$0xf]
    %v348 = vld [vmem:[#allocation5 + $0x38] sm:$0xf]
    %v349 = vld [vmem:[#allocation5 + $0x3c] sm:$0xf]
    %v350 = vld [vmem:[#allocation5 + $0x40] sm:$0xf]
    %v351 = vld [vmem:[#allocation5 + $0x44] sm:$0xf]
    %v352 = vld [vmem:[#allocation5 + $0x48] sm:$0xf]
    %v353 = vld [vmem:[#allocation5 + $0x4c] sm:$0xf]
    %v354 = vld [vmem:[#allocation5 + $0x50] sm:$0xf]
    %v355 = vld [vmem:[#allocation5 + $0x54] sm:$0xf]
    %v356 = vld [vmem:[#allocation5 + $0x58] sm:$0xf]
    %v357 = vld [vmem:[#allocation5 + $0x5c] sm:$0xf]
    %v358 = vld [vmem:[#allocation5 + $0x60] sm:$0xf]
    %v359 = vld [vmem:[#allocation5 + $0x64] sm:$0xf]
    %v360 = vld [vmem:[#allocation5 + $0x68] sm:$0xf]
    %v361 = vld [vmem:[#allocation5 + $0x6c] sm:$0xf]
    %v362 = vld [vmem:[#allocation5 + $0x70] sm:$0xf]
    %v363 = vld [vmem:[#allocation5 + $0x74] sm:$0xf]
    %v364 = vld [vmem:[#allocation5 + $0x78] sm:$0xf]
    %v365 = vld [vmem:[#allocation5 + $0x7c] sm:$0xf]
    %v366 = vld [vmem:[#allocation2 + $0x8] sm:$0xff]
    %v367 = vld [vmem:[#allocation2 + $0x40] sm:$0xff]
    %v368 = vld [vmem:[#allocation2 + $0x78] sm:$0xff]
    %v369 = vld [vmem:[#allocation2 + $0xb0] sm:$0xff]
    %v370 = vld [vmem:[#allocation2 + $0xe8] sm:$0xff]
    %v371 = vld [vmem:[#allocation2 + $0x120] sm:$0xff]
    %v372 = vld [vmem:[#allocation2 + $0x158] sm:$0xff]
    %v373 = vld [vmem:[#allocation2 + $0x190] sm:$0xff]
    %v382 = vunpack.c.l.b16 %v366
    %v383 = vunpack.c.h.b16 %v366
    %v384 = vunpack.c.l.b16 %v367
    %v385 = vunpack.c.h.b16 %v367
    %v386 = vunpack.c.l.b16 %v368
    %v387 = vunpack.c.h.b16 %v368
    %v388 = vunpack.c.l.b16 %v369
    %v389 = vunpack.c.h.b16 %v369
    %v390 = vunpack.c.l.b16 %v370
    %v391 = vunpack.c.h.b16 %v370
    %v392 = vunpack.c.l.b16 %v371
    %v393 = vunpack.c.h.b16 %v371
    %v394 = vunpack.c.l.b16 %v372
    %v395 = vunpack.c.h.b16 %v372
    %v396 = vunpack.c.l.b16 %v373
    %v397 = vunpack.c.h.b16 %v373
    %v398 = vpack.c.b16 %v384, %v382
    %v399 = vpack.c.b16 %v385, %v383
    %v400 = vpack.c.b16 %v388, %v386
    %v401 = vpack.c.b16 %v389, %v387
    %v402 = vpack.c.b16 %v392, %v390
    %v403 = vpack.c.b16 %v393, %v391
    %v404 = vpack.c.b16 %v396, %v394
    %v405 = vpack.c.b16 %v397, %v395
    %414 = vmatprep.subr.bf16.mxu0 0
    %415 = vmatpush1.bf16.msra.mxu0 0
    %416 = vmatprep.subr.bf16.mxu0 0
    %417 = vmatpush1.bf16.msra.mxu0 0
    %418 = vmatprep.subr.bf16.mxu0 0
    %419 = vmatpush1.bf16.msra.mxu0 0
    %420 = vmatprep.subr.bf16.mxu0 0
    %421 = vmatpush1.bf16.msra.mxu0 0
    %422 = vmatprep.subr.bf16.mxu0 %v405
    %423 = vmatpush1.bf16.msra.mxu0 %v404
    %424 = vmatprep.subr.bf16.mxu0 %v403
    %425 = vmatpush1.bf16.msra.mxu0 %v402
    %426 = vmatprep.subr.bf16.mxu0 %v401
    %427 = vmatpush1.bf16.msra.mxu0 %v400
    %428 = vmatprep.subr.bf16.mxu0 %v399
    %429 = vmatpush1.bf16.msra.mxu0 %v398
    %430 = vmatprep.subr.bf16.mxu0 0
    %431 = vmatpush2.bf16.msra.mxu0 0
    %432 = vmatprep.subr.bf16.mxu0 0
    %433 = vmatpush2.bf16.msra.mxu0 0
    %434 = vmatprep.subr.bf16.mxu0 0
    %435 = vmatpush2.bf16.msra.mxu0 0
    %436 = vmatprep.subr.bf16.mxu0 0
    %437 = vmatpush2.bf16.msra.mxu0 0
    %438 = vmatprep.subr.bf16.mxu0 0
    %439 = vmatpush2.bf16.msra.mxu0 0
    %440 = vmatprep.subr.bf16.mxu0 0
    %441 = vmatpush2.bf16.msra.mxu0 0
    %442 = vmatprep.subr.bf16.mxu0 0
    %443 = vmatpush2.bf16.msra.mxu0 0
    %444 = vmatprep.subr.bf16.mxu0 0
    %445 = vmatpush2.bf16.msra.mxu0 0
    %446 = vmatprep.mubr.bf16.mxu0 0
    %447 = vmatmul.mubr.bf16.gmra.mxu0 %v150
    %v448 = vpop.f32.mrf.mxu0
    %v449 = vadd.f32 0.0, %v448
    %v450 = vpop.f32.mrf.mxu0
    %v451 = vadd.f32 0.0, %v450
    %v452 = vpop.f32.mrf.mxu0
    %v453 = vadd.f32 0.0, %v452
    %v454 = vpop.f32.mrf.mxu0
    %v455 = vadd.f32 0.0, %v454
    %456 = vmatprep.mubr.bf16.mxu0 0
    %457 = vmatmul.mubr.bf16.gmra.mxu0 %v153
    %v458 = vpop.f32.mrf.mxu0
    %v459 = vadd.f32 0.0, %v458
    %v460 = vpop.f32.mrf.mxu0
    %v461 = vadd.f32 0.0, %v460
    %v462 = vpop.f32.mrf.mxu0
    %v463 = vadd.f32 0.0, %v462
    %v464 = vpop.f32.mrf.mxu0
    %v465 = vadd.f32 0.0, %v464
    %466 = vmatprep.mubr.bf16.mxu0 0
    %467 = vmatmul.mubr.bf16.gmra.mxu0 %v156
    %v468 = vpop.f32.mrf.mxu0
    %v469 = vadd.f32 0.0, %v468
    %v470 = vpop.f32.mrf.mxu0
    %v471 = vadd.f32 0.0, %v470
    %v472 = vpop.f32.mrf.mxu0
    %v473 = vadd.f32 0.0, %v472
    %v474 = vpop.f32.mrf.mxu0
    %v475 = vadd.f32 0.0, %v474
    %476 = vmatprep.mubr.bf16.mxu0 0
    %477 = vmatmul.mubr.bf16.gmra.mxu0 %v159
    %v478 = vpop.f32.mrf.mxu0
    %v479 = vadd.f32 0.0, %v478
    %v480 = vpop.f32.mrf.mxu0
    %v481 = vadd.f32 0.0, %v480
    %v482 = vpop.f32.mrf.mxu0
    %v483 = vadd.f32 0.0, %v482
    %v484 = vpop.f32.mrf.mxu0
    %v485 = vadd.f32 0.0, %v484
    %486 = vmatprep.mubr.bf16.mxu0 0
    %487 = vmatmul.mubr.bf16.gmra.mxu0 %v162
    %v488 = vpop.f32.mrf.mxu0
    %v489 = vadd.f32 0.0, %v488
    %v490 = vpop.f32.mrf.mxu0
    %v491 = vadd.f32 0.0, %v490
    %v492 = vpop.f32.mrf.mxu0
    %v493 = vadd.f32 0.0, %v492
    %v494 = vpop.f32.mrf.mxu0
    %v495 = vadd.f32 0.0, %v494
    %496 = vmatprep.mubr.bf16.mxu0 0
    %497 = vmatmul.mubr.bf16.gmra.mxu0 %v165
    %v498 = vpop.f32.mrf.mxu0
    %v499 = vadd.f32 0.0, %v498
    %v500 = vpop.f32.mrf.mxu0
    %v501 = vadd.f32 0.0, %v500
    %v502 = vpop.f32.mrf.mxu0
    %v503 = vadd.f32 0.0, %v502
    %v504 = vpop.f32.mrf.mxu0
    %v505 = vadd.f32 0.0, %v504
    %506 = vmatprep.mubr.bf16.mxu0 0
    %507 = vmatmul.mubr.bf16.gmra.mxu0 %v168
    %v508 = vpop.f32.mrf.mxu0
    %v509 = vadd.f32 0.0, %v508
    %v510 = vpop.f32.mrf.mxu0
    %v511 = vadd.f32 0.0, %v510
    %v512 = vpop.f32.mrf.mxu0
    %v513 = vadd.f32 0.0, %v512
    %v514 = vpop.f32.mrf.mxu0
    %v515 = vadd.f32 0.0, %v514
    %516 = vmatprep.mubr.bf16.mxu0 0
    %517 = vmatmul.mubr.bf16.gmra.mxu0 %v171
    %v518 = vpop.f32.mrf.mxu0
    %v519 = vadd.f32 0.0, %v518
    %v520 = vpop.f32.mrf.mxu0
    %v521 = vadd.f32 0.0, %v520
    %v522 = vpop.f32.mrf.mxu0
    %v523 = vadd.f32 0.0, %v522
    %v524 = vpop.f32.mrf.mxu0
    %v525 = vadd.f32 0.0, %v524
    %526 = vdwg.mxu0
    %v527 = vmax.f32 %v449, 0.0
    %v528 = vmax.f32 %v451, 0.0
    %v529 = vmax.f32 %v453, 0.0
    %v530 = vmax.f32 %v455, 0.0
    %v531 = vmax.f32 %v459, 0.0
    %v532 = vmax.f32 %v461, 0.0
    %v533 = vmax.f32 %v463, 0.0
    %v534 = vmax.f32 %v465, 0.0
    %v535 = vmax.f32 %v469, 0.0
    %v536 = vmax.f32 %v471, 0.0
    %v537 = vmax.f32 %v473, 0.0
    %v538 = vmax.f32 %v475, 0.0
    %v539 = vmax.f32 %v479, 0.0
    %v540 = vmax.f32 %v481, 0.0
    %v541 = vmax.f32 %v483, 0.0
    %v542 = vmax.f32 %v485, 0.0
    %v543 = vmax.f32 %v489, 0.0
    %v544 = vmax.f32 %v491, 0.0
    %v545 = vmax.f32 %v493, 0.0
    %v546 = vmax.f32 %v495, 0.0
    %v547 = vmax.f32 %v499, 0.0
    %v548 = vmax.f32 %v501, 0.0
    %v549 = vmax.f32 %v503, 0.0
    %v550 = vmax.f32 %v505, 0.0
    %v551 = vmax.f32 %v509, 0.0
    %v552 = vmax.f32 %v511, 0.0
    %v553 = vmax.f32 %v513, 0.0
    %v554 = vmax.f32 %v515, 0.0
    %v555 = vmax.f32 %v519, 0.0
    %v556 = vmax.f32 %v521, 0.0
    %v557 = vmax.f32 %v523, 0.0
    %v558 = vmax.f32 %v525, 0.0
    %v559 = vpack.c.bf16 %v529, %v527
    %v560 = vpack.c.bf16 %v530, %v528
    %v561 = vpack.c.bf16 %v533, %v531
    %v562 = vpack.c.bf16 %v534, %v532
    %v563 = vpack.c.bf16 %v537, %v535
    %v564 = vpack.c.bf16 %v538, %v536
    %v565 = vpack.c.bf16 %v541, %v539
    %v566 = vpack.c.bf16 %v542, %v540
    %v567 = vpack.c.bf16 %v545, %v543
    %v568 = vpack.c.bf16 %v546, %v544
    %v569 = vpack.c.bf16 %v549, %v547
    %v570 = vpack.c.bf16 %v550, %v548
    %v571 = vpack.c.bf16 %v553, %v551
    %v572 = vpack.c.bf16 %v554, %v552
    %v573 = vpack.c.bf16 %v557, %v555
    %v574 = vpack.c.bf16 %v558, %v556
    %v575 = vld [vmem:[#allocation5 + $0x80] sm:$0xf]
    %v576 = vld [vmem:[#allocation5 + $0x84] sm:$0xf]
    %v577 = vld [vmem:[#allocation5 + $0x88] sm:$0xf]
    %v578 = vld [vmem:[#allocation5 + $0x8c] sm:$0xf]
    %v579 = vld [vmem:[#allocation5 + $0x90] sm:$0xf]
    %v580 = vld [vmem:[#allocation5 + $0x94] sm:$0xf]
    %v581 = vld [vmem:[#allocation5 + $0x98] sm:$0xf]
    %v582 = vld [vmem:[#allocation5 + $0x9c] sm:$0xf]
    %v583 = vld [vmem:[#allocation5 + $0xa0] sm:$0xf]
    %v584 = vld [vmem:[#allocation5 + $0xa4] sm:$0xf]
    %v585 = vld [vmem:[#allocation5 + $0xa8] sm:$0xf]
    %v586 = vld [vmem:[#allocation5 + $0xac] sm:$0xf]
    %v587 = vld [vmem:[#allocation5 + $0xb0] sm:$0xf]
    %v588 = vld [vmem:[#allocation5 + $0xb4] sm:$0xf]
    %v589 = vld [vmem:[#allocation5 + $0xb8] sm:$0xf]
    %v590 = vld [vmem:[#allocation5 + $0xbc] sm:$0xf]
    %v591 = vld [vmem:[#allocation5 + $0xc0] sm:$0xf]
    %v592 = vld [vmem:[#allocation5 + $0xc4] sm:$0xf]
    %v593 = vld [vmem:[#allocation5 + $0xc8] sm:$0xf]
    %v594 = vld [vmem:[#allocation5 + $0xcc] sm:$0xf]
    %v595 = vld [vmem:[#allocation5 + $0xd0] sm:$0xf]
    %v596 = vld [vmem:[#allocation5 + $0xd4] sm:$0xf]
    %v597 = vld [vmem:[#allocation5 + $0xd8] sm:$0xf]
    %v598 = vld [vmem:[#allocation5 + $0xdc] sm:$0xf]
    %v599 = vld [vmem:[#allocation5 + $0xe0] sm:$0xf]
    %v600 = vld [vmem:[#allocation5 + $0xe4] sm:$0xf]
    %v601 = vld [vmem:[#allocation5 + $0xe8] sm:$0xf]
    %v602 = vld [vmem:[#allocation5 + $0xec] sm:$0xf]
    %v603 = vld [vmem:[#allocation5 + $0xf0] sm:$0xf]
    %v604 = vld [vmem:[#allocation5 + $0xf4] sm:$0xf]
    %v605 = vld [vmem:[#allocation5 + $0xf8] sm:$0xf]
    %v606 = vld [vmem:[#allocation5 + $0xfc] sm:$0xf]
    %v639 = vunpack.c.l.b16 %v575
    %v640 = vunpack.c.l.b16 %v576
    %v641 = vunpack.c.l.b16 %v577
    %v642 = vunpack.c.l.b16 %v578
    %v643 = vunpack.c.l.b16 %v579
    %v644 = vunpack.c.l.b16 %v580
    %v645 = vunpack.c.l.b16 %v581
    %v646 = vunpack.c.l.b16 %v582
    %v647 = vunpack.c.l.b16 %v583
    %v648 = vunpack.c.l.b16 %v584
    %v649 = vunpack.c.l.b16 %v585
    %v650 = vunpack.c.l.b16 %v586
    %v651 = vunpack.c.l.b16 %v587
    %v652 = vunpack.c.l.b16 %v588
    %v653 = vunpack.c.l.b16 %v589
    %v654 = vunpack.c.l.b16 %v590
    %v655 = vunpack.c.l.b16 %v591
    %v656 = vunpack.c.l.b16 %v592
    %v657 = vunpack.c.l.b16 %v593
    %v658 = vunpack.c.l.b16 %v594
    %v659 = vunpack.c.l.b16 %v595
    %v660 = vunpack.c.l.b16 %v596
    %v661 = vunpack.c.l.b16 %v597
    %v662 = vunpack.c.l.b16 %v598
    %v663 = vunpack.c.l.b16 %v599
    %v664 = vunpack.c.l.b16 %v600
    %v665 = vunpack.c.l.b16 %v601
    %v666 = vunpack.c.l.b16 %v602
    %v667 = vunpack.c.l.b16 %v603
    %v668 = vunpack.c.l.b16 %v604
    %v669 = vunpack.c.l.b16 %v605
    %v670 = vunpack.c.l.b16 %v606
    %v671 = vpack.c.b16 %v640, %v639
    %v672 = vpack.c.b16 %v642, %v641
    %v673 = vpack.c.b16 %v644, %v643
    %v674 = vpack.c.b16 %v646, %v645
    %v675 = vpack.c.b16 %v648, %v647
    %v676 = vpack.c.b16 %v650, %v649
    %v677 = vpack.c.b16 %v652, %v651
    %v678 = vpack.c.b16 %v654, %v653
    %v679 = vpack.c.b16 %v656, %v655
    %v680 = vpack.c.b16 %v658, %v657
    %v681 = vpack.c.b16 %v660, %v659
    %v682 = vpack.c.b16 %v662, %v661
    %v683 = vpack.c.b16 %v664, %v663
    %v684 = vpack.c.b16 %v666, %v665
    %v685 = vpack.c.b16 %v668, %v667
    %v686 = vpack.c.b16 %v670, %v669
    %703 = vmatprep.subr.bf16.mxu0 0
    %704 = vmatpush1.bf16.msra.mxu0 %v678
    %705 = vmatprep.subr.bf16.mxu0 0
    %706 = vmatpush1.bf16.msra.mxu0 %v677
    %707 = vmatprep.subr.bf16.mxu0 0
    %708 = vmatpush1.bf16.msra.mxu0 %v676
    %709 = vmatprep.subr.bf16.mxu0 0
    %710 = vmatpush1.bf16.msra.mxu0 %v675
    %711 = vmatprep.subr.bf16.mxu0 0
    %712 = vmatpush1.bf16.msra.mxu0 %v674
    %713 = vmatprep.subr.bf16.mxu0 0
    %714 = vmatpush1.bf16.msra.mxu0 %v673
    %715 = vmatprep.subr.bf16.mxu0 0
    %716 = vmatpush1.bf16.msra.mxu0 %v672
    %717 = vmatprep.subr.bf16.mxu0 0
    %718 = vmatpush1.bf16.msra.mxu0 %v671
    %719 = vmatprep.subr.bf16.mxu0 0
    %720 = vmatpush2.bf16.msra.mxu0 %v686
    %721 = vmatprep.subr.bf16.mxu0 0
    %722 = vmatpush2.bf16.msra.mxu0 %v685
    %723 = vmatprep.subr.bf16.mxu0 0
    %724 = vmatpush2.bf16.msra.mxu0 %v684
    %725 = vmatprep.subr.bf16.mxu0 0
    %726 = vmatpush2.bf16.msra.mxu0 %v683
    %727 = vmatprep.subr.bf16.mxu0 0
    %728 = vmatpush2.bf16.msra.mxu0 %v682
    %729 = vmatprep.subr.bf16.mxu0 0
    %730 = vmatpush2.bf16.msra.mxu0 %v681
    %731 = vmatprep.subr.bf16.mxu0 0
    %732 = vmatpush2.bf16.msra.mxu0 %v680
    %733 = vmatprep.subr.bf16.mxu0 0
    %734 = vmatpush2.bf16.msra.mxu0 %v679
    %735 = vmatprep.mubr.bf16.mxu0 %v560
    %736 = vmatmul.mubr.bf16.gmra.mxu0 %v559
    %v737 = vpop.f32.mrf.mxu0
    %v738 = vadd.f32 0.0, %v737
    %v739 = vpop.f32.mrf.mxu0
    %v740 = vpop.f32.mrf.mxu0
    %v741 = vadd.f32 0.0, %v740
    %v742 = vpop.f32.mrf.mxu0
    %743 = vmatprep.mubr.bf16.mxu0 %v562
    %744 = vmatmul.mubr.bf16.gmra.mxu0 %v561
    %v745 = vpop.f32.mrf.mxu0
    %v746 = vadd.f32 0.0, %v745
    %v747 = vpop.f32.mrf.mxu0
    %v748 = vpop.f32.mrf.mxu0
    %v749 = vadd.f32 0.0, %v748
    %v750 = vpop.f32.mrf.mxu0
    %751 = vmatprep.mubr.bf16.mxu0 %v564
    %752 = vmatmul.mubr.bf16.gmra.mxu0 %v563
    %v753 = vpop.f32.mrf.mxu0
    %v754 = vadd.f32 0.0, %v753
    %v755 = vpop.f32.mrf.mxu0
    %v756 = vpop.f32.mrf.mxu0
    %v757 = vadd.f32 0.0, %v756
    %v758 = vpop.f32.mrf.mxu0
    %759 = vmatprep.mubr.bf16.mxu0 %v566
    %760 = vmatmul.mubr.bf16.gmra.mxu0 %v565
    %v761 = vpop.f32.mrf.mxu0
    %v762 = vadd.f32 0.0, %v761
    %v763 = vpop.f32.mrf.mxu0
    %v764 = vpop.f32.mrf.mxu0
    %v765 = vadd.f32 0.0, %v764
    %v766 = vpop.f32.mrf.mxu0
    %767 = vmatprep.mubr.bf16.mxu0 %v568
    %768 = vmatmul.mubr.bf16.gmra.mxu0 %v567
    %v769 = vpop.f32.mrf.mxu0
    %v770 = vadd.f32 0.0, %v769
    %v771 = vpop.f32.mrf.mxu0
    %v772 = vpop.f32.mrf.mxu0
    %v773 = vadd.f32 0.0, %v772
    %v774 = vpop.f32.mrf.mxu0
    %775 = vmatprep.mubr.bf16.mxu0 %v570
    %776 = vmatmul.mubr.bf16.gmra.mxu0 %v569
    %v777 = vpop.f32.mrf.mxu0
    %v778 = vadd.f32 0.0, %v777
    %v779 = vpop.f32.mrf.mxu0
    %v780 = vpop.f32.mrf.mxu0
    %v781 = vadd.f32 0.0, %v780
    %v782 = vpop.f32.mrf.mxu0
    %783 = vmatprep.mubr.bf16.mxu0 %v572
    %784 = vmatmul.mubr.bf16.gmra.mxu0 %v571
    %v785 = vpop.f32.mrf.mxu0
    %v786 = vadd.f32 0.0, %v785
    %v787 = vpop.f32.mrf.mxu0
    %v788 = vpop.f32.mrf.mxu0
    %v789 = vadd.f32 0.0, %v788
    %v790 = vpop.f32.mrf.mxu0
    %791 = vmatprep.mubr.bf16.mxu0 %v574
    %792 = vmatmul.mubr.bf16.gmra.mxu0 %v573
    %v793 = vpop.f32.mrf.mxu0
    %v794 = vadd.f32 0.0, %v793
    %v795 = vpop.f32.mrf.mxu0
    %v796 = vpop.f32.mrf.mxu0
    %v797 = vadd.f32 0.0, %v796
    %v798 = vpop.f32.mrf.mxu0
    %799 = vdwg.mxu0
    %v832 = vunpack.c.l.b16 %v334
    %v833 = vunpack.c.l.b16 %v335
    %v834 = vunpack.c.l.b16 %v336
    %v835 = vunpack.c.l.b16 %v337
    %v836 = vunpack.c.l.b16 %v338
    %v837 = vunpack.c.l.b16 %v339
    %v838 = vunpack.c.l.b16 %v340
    %v839 = vunpack.c.l.b16 %v341
    %v840 = vunpack.c.l.b16 %v342
    %v841 = vunpack.c.l.b16 %v343
    %v842 = vunpack.c.l.b16 %v344
    %v843 = vunpack.c.l.b16 %v345
    %v844 = vunpack.c.l.b16 %v346
    %v845 = vunpack.c.l.b16 %v347
    %v846 = vunpack.c.l.b16 %v348
    %v847 = vunpack.c.l.b16 %v349
    %v848 = vunpack.c.l.b16 %v350
    %v849 = vunpack.c.l.b16 %v351
    %v850 = vunpack.c.l.b16 %v352
    %v851 = vunpack.c.l.b16 %v353
    %v852 = vunpack.c.l.b16 %v354
    %v853 = vunpack.c.l.b16 %v355
    %v854 = vunpack.c.l.b16 %v356
    %v855 = vunpack.c.l.b16 %v357
    %v856 = vunpack.c.l.b16 %v358
    %v857 = vunpack.c.l.b16 %v359
    %v858 = vunpack.c.l.b16 %v360
    %v859 = vunpack.c.l.b16 %v361
    %v860 = vunpack.c.l.b16 %v362
    %v861 = vunpack.c.l.b16 %v363
    %v862 = vunpack.c.l.b16 %v364
    %v863 = vunpack.c.l.b16 %v365
    %v864 = vpack.c.b16 %v833, %v832
    %v865 = vpack.c.b16 %v835, %v834
    %v866 = vpack.c.b16 %v837, %v836
    %v867 = vpack.c.b16 %v839, %v838
    %v868 = vpack.c.b16 %v841, %v840
    %v869 = vpack.c.b16 %v843, %v842
    %v870 = vpack.c.b16 %v845, %v844
    %v871 = vpack.c.b16 %v847, %v846
    %v872 = vpack.c.b16 %v849, %v848
    %v873 = vpack.c.b16 %v851, %v850
    %v874 = vpack.c.b16 %v853, %v852
    %v875 = vpack.c.b16 %v855, %v854
    %v876 = vpack.c.b16 %v857, %v856
    %v877 = vpack.c.b16 %v859, %v858
    %v878 = vpack.c.b16 %v861, %v860
    %v879 = vpack.c.b16 %v863, %v862
    %896 = vmatprep.subr.bf16.mxu0 0
    %897 = vmatpush1.bf16.msra.mxu0 %v871
    %898 = vmatprep.subr.bf16.mxu0 0
    %899 = vmatpush1.bf16.msra.mxu0 %v870
    %900 = vmatprep.subr.bf16.mxu0 0
    %901 = vmatpush1.bf16.msra.mxu0 %v869
    %902 = vmatprep.subr.bf16.mxu0 0
    %903 = vmatpush1.bf16.msra.mxu0 %v868
    %904 = vmatprep.subr.bf16.mxu0 0
    %905 = vmatpush1.bf16.msra.mxu0 %v867
    %906 = vmatprep.subr.bf16.mxu0 0
    %907 = vmatpush1.bf16.msra.mxu0 %v866
    %908 = vmatprep.subr.bf16.mxu0 0
    %909 = vmatpush1.bf16.msra.mxu0 %v865
    %910 = vmatprep.subr.bf16.mxu0 0
    %911 = vmatpush1.bf16.msra.mxu0 %v864
    %912 = vmatprep.subr.bf16.mxu0 0
    %913 = vmatpush2.bf16.msra.mxu0 %v879
    %914 = vmatprep.subr.bf16.mxu0 0
    %915 = vmatpush2.bf16.msra.mxu0 %v878
    %916 = vmatprep.subr.bf16.mxu0 0
    %917 = vmatpush2.bf16.msra.mxu0 %v877
    %918 = vmatprep.subr.bf16.mxu0 0
    %919 = vmatpush2.bf16.msra.mxu0 %v876
    %920 = vmatprep.subr.bf16.mxu0 0
    %921 = vmatpush2.bf16.msra.mxu0 %v875
    %922 = vmatprep.subr.bf16.mxu0 0
    %923 = vmatpush2.bf16.msra.mxu0 %v874
    %924 = vmatprep.subr.bf16.mxu0 0
    %925 = vmatpush2.bf16.msra.mxu0 %v873
    %926 = vmatprep.subr.bf16.mxu0 0
    %927 = vmatpush2.bf16.msra.mxu0 %v872
    %928 = vmatprep.mubr.bf16.mxu0 %v319
    %929 = vmatmul.mubr.bf16.gmra.mxu0 %v318
    %v930 = vpop.f32.mrf.mxu0
    %v931 = vadd.f32 %v738, %v930
    %v932 = vpop.f32.mrf.mxu0
    %v933 = vpop.f32.mrf.mxu0
    %v934 = vadd.f32 %v741, %v933
    %v935 = vpop.f32.mrf.mxu0
    %936 = vmatprep.mubr.bf16.mxu0 %v321
    %937 = vmatmul.mubr.bf16.gmra.mxu0 %v320
    %v938 = vpop.f32.mrf.mxu0
    %v939 = vadd.f32 %v746, %v938
    %v940 = vpop.f32.mrf.mxu0
    %v941 = vpop.f32.mrf.mxu0
    %v942 = vadd.f32 %v749, %v941
    %v943 = vpop.f32.mrf.mxu0
    %944 = vmatprep.mubr.bf16.mxu0 %v323
    %945 = vmatmul.mubr.bf16.gmra.mxu0 %v322
    %v946 = vpop.f32.mrf.mxu0
    %v947 = vadd.f32 %v754, %v946
    %v948 = vpop.f32.mrf.mxu0
    %v949 = vpop.f32.mrf.mxu0
    %v950 = vadd.f32 %v757, %v949
    %v951 = vpop.f32.mrf.mxu0
    %952 = vmatprep.mubr.bf16.mxu0 %v325
    %953 = vmatmul.mubr.bf16.gmra.mxu0 %v324
    %v954 = vpop.f32.mrf.mxu0
    %v955 = vadd.f32 %v762, %v954
    %v956 = vpop.f32.mrf.mxu0
    %v957 = vpop.f32.mrf.mxu0
    %v958 = vadd.f32 %v765, %v957
    %v959 = vpop.f32.mrf.mxu0
    %960 = vmatprep.mubr.bf16.mxu0 %v327
    %961 = vmatmul.mubr.bf16.gmra.mxu0 %v326
    %v962 = vpop.f32.mrf.mxu0
    %v963 = vadd.f32 %v770, %v962
    %v964 = vpop.f32.mrf.mxu0
    %v965 = vpop.f32.mrf.mxu0
    %v966 = vadd.f32 %v773, %v965
    %v967 = vpop.f32.mrf.mxu0
    %968 = vmatprep.mubr.bf16.mxu0 %v329
    %969 = vmatmul.mubr.bf16.gmra.mxu0 %v328
    %v970 = vpop.f32.mrf.mxu0
    %v971 = vadd.f32 %v778, %v970
    %v972 = vpop.f32.mrf.mxu0
    %v973 = vpop.f32.mrf.mxu0
    %v974 = vadd.f32 %v781, %v973
    %v975 = vpop.f32.mrf.mxu0
    %976 = vmatprep.mubr.bf16.mxu0 %v331
    %977 = vmatmul.mubr.bf16.gmra.mxu0 %v330
    %v978 = vpop.f32.mrf.mxu0
    %v979 = vadd.f32 %v786, %v978
    %v980 = vpop.f32.mrf.mxu0
    %v981 = vpop.f32.mrf.mxu0
    %v982 = vadd.f32 %v789, %v981
    %v983 = vpop.f32.mrf.mxu0
    %984 = vmatprep.mubr.bf16.mxu0 %v333
    %985 = vmatmul.mubr.bf16.gmra.mxu0 %v332
    %v986 = vpop.f32.mrf.mxu0
    %v987 = vadd.f32 %v794, %v986
    %v988 = vpop.f32.mrf.mxu0
    %v989 = vpop.f32.mrf.mxu0
    %v990 = vadd.f32 %v797, %v989
    %v991 = vpop.f32.mrf.mxu0
    %992 = vdwg.mxu0
    %v993 = vld [vmem:[#allocation2 + $0x10] sm:$0xff]
    %v994 = vld [vmem:[#allocation2 + $0x48] sm:$0xff]
    %v995 = vld [vmem:[#allocation2 + $0x80] sm:$0xff]
    %v996 = vld [vmem:[#allocation2 + $0xb8] sm:$0xff]
    %v997 = vld [vmem:[#allocation2 + $0xf0] sm:$0xff]
    %v998 = vld [vmem:[#allocation2 + $0x128] sm:$0xff]
    %v999 = vld [vmem:[#allocation2 + $0x160] sm:$0xff]
    %v1000 = vld [vmem:[#allocation2 + $0x198] sm:$0xff]
    %v1009 = vunpack.c.l.b16 %v993
    %v1010 = vunpack.c.h.b16 %v993
    %v1011 = vunpack.c.l.b16 %v994
    %v1012 = vunpack.c.h.b16 %v994
    %v1013 = vunpack.c.l.b16 %v995
    %v1014 = vunpack.c.h.b16 %v995
    %v1015 = vunpack.c.l.b16 %v996
    %v1016 = vunpack.c.h.b16 %v996
    %v1017 = vunpack.c.l.b16 %v997
    %v1018 = vunpack.c.h.b16 %v997
    %v1019 = vunpack.c.l.b16 %v998
    %v1020 = vunpack.c.h.b16 %v998
    %v1021 = vunpack.c.l.b16 %v999
    %v1022 = vunpack.c.h.b16 %v999
    %v1023 = vunpack.c.l.b16 %v1000
    %v1024 = vunpack.c.h.b16 %v1000
    %v1025 = vpack.c.b16 %v1011, %v1009
    %v1026 = vpack.c.b16 %v1012, %v1010
    %v1027 = vpack.c.b16 %v1015, %v1013
    %v1028 = vpack.c.b16 %v1016, %v1014
    %v1029 = vpack.c.b16 %v1019, %v1017
    %v1030 = vpack.c.b16 %v1020, %v1018
    %v1031 = vpack.c.b16 %v1023, %v1021
    %v1032 = vpack.c.b16 %v1024, %v1022
    %1041 = vmatprep.subr.bf16.mxu0 0
    %1042 = vmatpush1.bf16.msra.mxu0 0
    %1043 = vmatprep.subr.bf16.mxu0 0
    %1044 = vmatpush1.bf16.msra.mxu0 0
    %1045 = vmatprep.subr.bf16.mxu0 0
    %1046 = vmatpush1.bf16.msra.mxu0 0
    %1047 = vmatprep.subr.bf16.mxu0 0
    %1048 = vmatpush1.bf16.msra.mxu0 0
    %1049 = vmatprep.subr.bf16.mxu0 %v1032
    %1050 = vmatpush1.bf16.msra.mxu0 %v1031
    %1051 = vmatprep.subr.bf16.mxu0 %v1030
    %1052 = vmatpush1.bf16.msra.mxu0 %v1029
    %1053 = vmatprep.subr.bf16.mxu0 %v1028
    %1054 = vmatpush1.bf16.msra.mxu0 %v1027
    %1055 = vmatprep.subr.bf16.mxu0 %v1026
    %1056 = vmatpush1.bf16.msra.mxu0 %v1025
    %1057 = vmatprep.subr.bf16.mxu0 0
    %1058 = vmatpush2.bf16.msra.mxu0 0
    %1059 = vmatprep.subr.bf16.mxu0 0
    %1060 = vmatpush2.bf16.msra.mxu0 0
    %1061 = vmatprep.subr.bf16.mxu0 0
    %1062 = vmatpush2.bf16.msra.mxu0 0
    %1063 = vmatprep.subr.bf16.mxu0 0
    %1064 = vmatpush2.bf16.msra.mxu0 0
    %1065 = vmatprep.subr.bf16.mxu0 0
    %1066 = vmatpush2.bf16.msra.mxu0 0
    %1067 = vmatprep.subr.bf16.mxu0 0
    %1068 = vmatpush2.bf16.msra.mxu0 0
    %1069 = vmatprep.subr.bf16.mxu0 0
    %1070 = vmatpush2.bf16.msra.mxu0 0
    %1071 = vmatprep.subr.bf16.mxu0 0
    %1072 = vmatpush2.bf16.msra.mxu0 0
    %1073 = vmatprep.mubr.bf16.mxu0 0
    %1074 = vmatmul.mubr.bf16.gmra.mxu0 %v150
    %v1075 = vpop.f32.mrf.mxu0
    %v1076 = vadd.f32 0.0, %v1075
    %v1077 = vpop.f32.mrf.mxu0
    %v1078 = vadd.f32 0.0, %v1077
    %v1079 = vpop.f32.mrf.mxu0
    %v1080 = vadd.f32 0.0, %v1079
    %v1081 = vpop.f32.mrf.mxu0
    %v1082 = vadd.f32 0.0, %v1081
    %1083 = vmatprep.mubr.bf16.mxu0 0
    %1084 = vmatmul.mubr.bf16.gmra.mxu0 %v153
    %v1085 = vpop.f32.mrf.mxu0
    %v1086 = vadd.f32 0.0, %v1085
    %v1087 = vpop.f32.mrf.mxu0
    %v1088 = vadd.f32 0.0, %v1087
    %v1089 = vpop.f32.mrf.mxu0
    %v1090 = vadd.f32 0.0, %v1089
    %v1091 = vpop.f32.mrf.mxu0
    %v1092 = vadd.f32 0.0, %v1091
    %1093 = vmatprep.mubr.bf16.mxu0 0
    %1094 = vmatmul.mubr.bf16.gmra.mxu0 %v156
    %v1095 = vpop.f32.mrf.mxu0
    %v1096 = vadd.f32 0.0, %v1095
    %v1097 = vpop.f32.mrf.mxu0
    %v1098 = vadd.f32 0.0, %v1097
    %v1099 = vpop.f32.mrf.mxu0
    %v1100 = vadd.f32 0.0, %v1099
    %v1101 = vpop.f32.mrf.mxu0
    %v1102 = vadd.f32 0.0, %v1101
    %1103 = vmatprep.mubr.bf16.mxu0 0
    %1104 = vmatmul.mubr.bf16.gmra.mxu0 %v159
    %v1105 = vpop.f32.mrf.mxu0
    %v1106 = vadd.f32 0.0, %v1105
    %v1107 = vpop.f32.mrf.mxu0
    %v1108 = vadd.f32 0.0, %v1107
    %v1109 = vpop.f32.mrf.mxu0
    %v1110 = vadd.f32 0.0, %v1109
    %v1111 = vpop.f32.mrf.mxu0
    %v1112 = vadd.f32 0.0, %v1111
    %1113 = vmatprep.mubr.bf16.mxu0 0
    %1114 = vmatmul.mubr.bf16.gmra.mxu0 %v162
    %v1115 = vpop.f32.mrf.mxu0
    %v1116 = vadd.f32 0.0, %v1115
    %v1117 = vpop.f32.mrf.mxu0
    %v1118 = vadd.f32 0.0, %v1117
    %v1119 = vpop.f32.mrf.mxu0
    %v1120 = vadd.f32 0.0, %v1119
    %v1121 = vpop.f32.mrf.mxu0
    %v1122 = vadd.f32 0.0, %v1121
    %1123 = vmatprep.mubr.bf16.mxu0 0
    %1124 = vmatmul.mubr.bf16.gmra.mxu0 %v165
    %v1125 = vpop.f32.mrf.mxu0
    %v1126 = vadd.f32 0.0, %v1125
    %v1127 = vpop.f32.mrf.mxu0
    %v1128 = vadd.f32 0.0, %v1127
    %v1129 = vpop.f32.mrf.mxu0
    %v1130 = vadd.f32 0.0, %v1129
    %v1131 = vpop.f32.mrf.mxu0
    %v1132 = vadd.f32 0.0, %v1131
    %1133 = vmatprep.mubr.bf16.mxu0 0
    %1134 = vmatmul.mubr.bf16.gmra.mxu0 %v168
    %v1135 = vpop.f32.mrf.mxu0
    %v1136 = vadd.f32 0.0, %v1135
    %v1137 = vpop.f32.mrf.mxu0
    %v1138 = vadd.f32 0.0, %v1137
    %v1139 = vpop.f32.mrf.mxu0
    %v1140 = vadd.f32 0.0, %v1139
    %v1141 = vpop.f32.mrf.mxu0
    %v1142 = vadd.f32 0.0, %v1141
    %1143 = vmatprep.mubr.bf16.mxu0 0
    %1144 = vmatmul.mubr.bf16.gmra.mxu0 %v171
    %v1145 = vpop.f32.mrf.mxu0
    %v1146 = vadd.f32 0.0, %v1145
    %v1147 = vpop.f32.mrf.mxu0
    %v1148 = vadd.f32 0.0, %v1147
    %v1149 = vpop.f32.mrf.mxu0
    %v1150 = vadd.f32 0.0, %v1149
    %v1151 = vpop.f32.mrf.mxu0
    %v1152 = vadd.f32 0.0, %v1151
    %1153 = vdwg.mxu0
    %v1154 = vmax.f32 %v1076, 0.0
    %v1155 = vmax.f32 %v1078, 0.0
    %v1156 = vmax.f32 %v1080, 0.0
    %v1157 = vmax.f32 %v1082, 0.0
    %v1158 = vmax.f32 %v1086, 0.0
    %v1159 = vmax.f32 %v1088, 0.0
    %v1160 = vmax.f32 %v1090, 0.0
    %v1161 = vmax.f32 %v1092, 0.0
    %v1162 = vmax.f32 %v1096, 0.0
    %v1163 = vmax.f32 %v1098, 0.0
    %v1164 = vmax.f32 %v1100, 0.0
    %v1165 = vmax.f32 %v1102, 0.0
    %v1166 = vmax.f32 %v1106, 0.0
    %v1167 = vmax.f32 %v1108, 0.0
    %v1168 = vmax.f32 %v1110, 0.0
    %v1169 = vmax.f32 %v1112, 0.0
    %v1170 = vmax.f32 %v1116, 0.0
    %v1171 = vmax.f32 %v1118, 0.0
    %v1172 = vmax.f32 %v1120, 0.0
    %v1173 = vmax.f32 %v1122, 0.0
    %v1174 = vmax.f32 %v1126, 0.0
    %v1175 = vmax.f32 %v1128, 0.0
    %v1176 = vmax.f32 %v1130, 0.0
    %v1177 = vmax.f32 %v1132, 0.0
    %v1178 = vmax.f32 %v1136, 0.0
    %v1179 = vmax.f32 %v1138, 0.0
    %v1180 = vmax.f32 %v1140, 0.0
    %v1181 = vmax.f32 %v1142, 0.0
    %v1182 = vmax.f32 %v1146, 0.0
    %v1183 = vmax.f32 %v1148, 0.0
    %v1184 = vmax.f32 %v1150, 0.0
    %v1185 = vmax.f32 %v1152, 0.0
    %v1186 = vpack.c.bf16 %v1156, %v1154
    %v1187 = vpack.c.bf16 %v1157, %v1155
    %v1188 = vpack.c.bf16 %v1160, %v1158
    %v1189 = vpack.c.bf16 %v1161, %v1159
    %v1190 = vpack.c.bf16 %v1164, %v1162
    %v1191 = vpack.c.bf16 %v1165, %v1163
    %v1192 = vpack.c.bf16 %v1168, %v1166
    %v1193 = vpack.c.bf16 %v1169, %v1167
    %v1194 = vpack.c.bf16 %v1172, %v1170
    %v1195 = vpack.c.bf16 %v1173, %v1171
    %v1196 = vpack.c.bf16 %v1176, %v1174
    %v1197 = vpack.c.bf16 %v1177, %v1175
    %v1198 = vpack.c.bf16 %v1180, %v1178
    %v1199 = vpack.c.bf16 %v1181, %v1179
    %v1200 = vpack.c.bf16 %v1184, %v1182
    %v1201 = vpack.c.bf16 %v1185, %v1183
    %v1202 = vld [vmem:[#allocation5 + $0x100] sm:$0xf]
    %v1203 = vld [vmem:[#allocation5 + $0x104] sm:$0xf]
    %v1204 = vld [vmem:[#allocation5 + $0x108] sm:$0xf]
    %v1205 = vld [vmem:[#allocation5 + $0x10c] sm:$0xf]
    %v1206 = vld [vmem:[#allocation5 + $0x110] sm:$0xf]
    %v1207 = vld [vmem:[#allocation5 + $0x114] sm:$0xf]
    %v1208 = vld [vmem:[#allocation5 + $0x118] sm:$0xf]
    %v1209 = vld [vmem:[#allocation5 + $0x11c] sm:$0xf]
    %v1210 = vld [vmem:[#allocation5 + $0x120] sm:$0xf]
    %v1211 = vld [vmem:[#allocation5 + $0x124] sm:$0xf]
    %v1212 = vld [vmem:[#allocation5 + $0x128] sm:$0xf]
    %v1213 = vld [vmem:[#allocation5 + $0x12c] sm:$0xf]
    %v1214 = vld [vmem:[#allocation5 + $0x130] sm:$0xf]
    %v1215 = vld [vmem:[#allocation5 + $0x134] sm:$0xf]
    %v1216 = vld [vmem:[#allocation5 + $0x138] sm:$0xf]
    %v1217 = vld [vmem:[#allocation5 + $0x13c] sm:$0xf]
    %v1218 = vld [vmem:[#allocation5 + $0x140] sm:$0xf]
    %v1219 = vld [vmem:[#allocation5 + $0x144] sm:$0xf]
    %v1220 = vld [vmem:[#allocation5 + $0x148] sm:$0xf]
    %v1221 = vld [vmem:[#allocation5 + $0x14c] sm:$0xf]
    %v1222 = vld [vmem:[#allocation5 + $0x150] sm:$0xf]
    %v1223 = vld [vmem:[#allocation5 + $0x154] sm:$0xf]
    %v1224 = vld [vmem:[#allocation5 + $0x158] sm:$0xf]
    %v1225 = vld [vmem:[#allocation5 + $0x15c] sm:$0xf]
    %v1226 = vld [vmem:[#allocation5 + $0x160] sm:$0xf]
    %v1227 = vld [vmem:[#allocation5 + $0x164] sm:$0xf]
    %v1228 = vld [vmem:[#allocation5 + $0x168] sm:$0xf]
    %v1229 = vld [vmem:[#allocation5 + $0x16c] sm:$0xf]
    %v1230 = vld [vmem:[#allocation5 + $0x170] sm:$0xf]
    %v1231 = vld [vmem:[#allocation5 + $0x174] sm:$0xf]
    %v1232 = vld [vmem:[#allocation5 + $0x178] sm:$0xf]
    %v1233 = vld [vmem:[#allocation5 + $0x17c] sm:$0xf]
    %v1266 = vunpack.c.l.b16 %v1202
    %v1267 = vunpack.c.l.b16 %v1203
    %v1268 = vunpack.c.l.b16 %v1204
    %v1269 = vunpack.c.l.b16 %v1205
    %v1270 = vunpack.c.l.b16 %v1206
    %v1271 = vunpack.c.l.b16 %v1207
    %v1272 = vunpack.c.l.b16 %v1208
    %v1273 = vunpack.c.l.b16 %v1209
    %v1274 = vunpack.c.l.b16 %v1210
    %v1275 = vunpack.c.l.b16 %v1211
    %v1276 = vunpack.c.l.b16 %v1212
    %v1277 = vunpack.c.l.b16 %v1213
    %v1278 = vunpack.c.l.b16 %v1214
    %v1279 = vunpack.c.l.b16 %v1215
    %v1280 = vunpack.c.l.b16 %v1216
    %v1281 = vunpack.c.l.b16 %v1217
    %v1282 = vunpack.c.l.b16 %v1218
    %v1283 = vunpack.c.l.b16 %v1219
    %v1284 = vunpack.c.l.b16 %v1220
    %v1285 = vunpack.c.l.b16 %v1221
    %v1286 = vunpack.c.l.b16 %v1222
    %v1287 = vunpack.c.l.b16 %v1223
    %v1288 = vunpack.c.l.b16 %v1224
    %v1289 = vunpack.c.l.b16 %v1225
    %v1290 = vunpack.c.l.b16 %v1226
    %v1291 = vunpack.c.l.b16 %v1227
    %v1292 = vunpack.c.l.b16 %v1228
    %v1293 = vunpack.c.l.b16 %v1229
    %v1294 = vunpack.c.l.b16 %v1230
    %v1295 = vunpack.c.l.b16 %v1231
    %v1296 = vunpack.c.l.b16 %v1232
    %v1297 = vunpack.c.l.b16 %v1233
    %v1298 = vpack.c.b16 %v1267, %v1266
    %v1299 = vpack.c.b16 %v1269, %v1268
    %v1300 = vpack.c.b16 %v1271, %v1270
    %v1301 = vpack.c.b16 %v1273, %v1272
    %v1302 = vpack.c.b16 %v1275, %v1274
    %v1303 = vpack.c.b16 %v1277, %v1276
    %v1304 = vpack.c.b16 %v1279, %v1278
    %v1305 = vpack.c.b16 %v1281, %v1280
    %v1306 = vpack.c.b16 %v1283, %v1282
    %v1307 = vpack.c.b16 %v1285, %v1284
    %v1308 = vpack.c.b16 %v1287, %v1286
    %v1309 = vpack.c.b16 %v1289, %v1288
    %v1310 = vpack.c.b16 %v1291, %v1290
    %v1311 = vpack.c.b16 %v1293, %v1292
    %v1312 = vpack.c.b16 %v1295, %v1294
    %v1313 = vpack.c.b16 %v1297, %v1296
    %1330 = vmatprep.subr.bf16.mxu0 0
    %1331 = vmatpush1.bf16.msra.mxu0 %v1305
    %1332 = vmatprep.subr.bf16.mxu0 0
    %1333 = vmatpush1.bf16.msra.mxu0 %v1304
    %1334 = vmatprep.subr.bf16.mxu0 0
    %1335 = vmatpush1.bf16.msra.mxu0 %v1303
    %1336 = vmatprep.subr.bf16.mxu0 0
    %1337 = vmatpush1.bf16.msra.mxu0 %v1302
    %1338 = vmatprep.subr.bf16.mxu0 0
    %1339 = vmatpush1.bf16.msra.mxu0 %v1301
    %1340 = vmatprep.subr.bf16.mxu0 0
    %1341 = vmatpush1.bf16.msra.mxu0 %v1300
    %1342 = vmatprep.subr.bf16.mxu0 0
    %1343 = vmatpush1.bf16.msra.mxu0 %v1299
    %1344 = vmatprep.subr.bf16.mxu0 0
    %1345 = vmatpush1.bf16.msra.mxu0 %v1298
    %1346 = vmatprep.subr.bf16.mxu0 0
    %1347 = vmatpush2.bf16.msra.mxu0 %v1313
    %1348 = vmatprep.subr.bf16.mxu0 0
    %1349 = vmatpush2.bf16.msra.mxu0 %v1312
    %1350 = vmatprep.subr.bf16.mxu0 0
    %1351 = vmatpush2.bf16.msra.mxu0 %v1311
    %1352 = vmatprep.subr.bf16.mxu0 0
    %1353 = vmatpush2.bf16.msra.mxu0 %v1310
    %1354 = vmatprep.subr.bf16.mxu0 0
    %1355 = vmatpush2.bf16.msra.mxu0 %v1309
    %1356 = vmatprep.subr.bf16.mxu0 0
    %1357 = vmatpush2.bf16.msra.mxu0 %v1308
    %1358 = vmatprep.subr.bf16.mxu0 0
    %1359 = vmatpush2.bf16.msra.mxu0 %v1307
    %1360 = vmatprep.subr.bf16.mxu0 0
    %1361 = vmatpush2.bf16.msra.mxu0 %v1306
    %1362 = vmatprep.mubr.bf16.mxu0 %v1187
    %1363 = vmatmul.mubr.bf16.gmra.mxu0 %v1186
    %v1364 = vpop.f32.mrf.mxu0
    %v1365 = vadd.f32 0.0, %v1364
    %v1366 = vpop.f32.mrf.mxu0
    %v1367 = vpop.f32.mrf.mxu0
    %v1368 = vadd.f32 0.0, %v1367
    %v1369 = vpop.f32.mrf.mxu0
    %1370 = vmatprep.mubr.bf16.mxu0 %v1189
    %1371 = vmatmul.mubr.bf16.gmra.mxu0 %v1188
    %v1372 = vpop.f32.mrf.mxu0
    %v1373 = vadd.f32 0.0, %v1372
    %v1374 = vpop.f32.mrf.mxu0
    %v1375 = vpop.f32.mrf.mxu0
    %v1376 = vadd.f32 0.0, %v1375
    %v1377 = vpop.f32.mrf.mxu0
    %1378 = vmatprep.mubr.bf16.mxu0 %v1191
    %1379 = vmatmul.mubr.bf16.gmra.mxu0 %v1190
    %v1380 = vpop.f32.mrf.mxu0
    %v1381 = vadd.f32 0.0, %v1380
    %v1382 = vpop.f32.mrf.mxu0
    %v1383 = vpop.f32.mrf.mxu0
    %v1384 = vadd.f32 0.0, %v1383
    %v1385 = vpop.f32.mrf.mxu0
    %1386 = vmatprep.mubr.bf16.mxu0 %v1193
    %1387 = vmatmul.mubr.bf16.gmra.mxu0 %v1192
    %v1388 = vpop.f32.mrf.mxu0
    %v1389 = vadd.f32 0.0, %v1388
    %v1390 = vpop.f32.mrf.mxu0
    %v1391 = vpop.f32.mrf.mxu0
    %v1392 = vadd.f32 0.0, %v1391
    %v1393 = vpop.f32.mrf.mxu0
    %1394 = vmatprep.mubr.bf16.mxu0 %v1195
    %1395 = vmatmul.mubr.bf16.gmra.mxu0 %v1194
    %v1396 = vpop.f32.mrf.mxu0
    %v1397 = vadd.f32 0.0, %v1396
    %v1398 = vpop.f32.mrf.mxu0
    %v1399 = vpop.f32.mrf.mxu0
    %v1400 = vadd.f32 0.0, %v1399
    %v1401 = vpop.f32.mrf.mxu0
    %1402 = vmatprep.mubr.bf16.mxu0 %v1197
    %1403 = vmatmul.mubr.bf16.gmra.mxu0 %v1196
    %v1404 = vpop.f32.mrf.mxu0
    %v1405 = vadd.f32 0.0, %v1404
    %v1406 = vpop.f32.mrf.mxu0
    %v1407 = vpop.f32.mrf.mxu0
    %v1408 = vadd.f32 0.0, %v1407
    %v1409 = vpop.f32.mrf.mxu0
    %1410 = vmatprep.mubr.bf16.mxu0 %v1199
    %1411 = vmatmul.mubr.bf16.gmra.mxu0 %v1198
    %v1412 = vpop.f32.mrf.mxu0
    %v1413 = vadd.f32 0.0, %v1412
    %v1414 = vpop.f32.mrf.mxu0
    %v1415 = vpop.f32.mrf.mxu0
    %v1416 = vadd.f32 0.0, %v1415
    %v1417 = vpop.f32.mrf.mxu0
    %1418 = vmatprep.mubr.bf16.mxu0 %v1201
    %1419 = vmatmul.mubr.bf16.gmra.mxu0 %v1200
    %v1420 = vpop.f32.mrf.mxu0
    %v1421 = vadd.f32 0.0, %v1420
    %v1422 = vpop.f32.mrf.mxu0
    %v1423 = vpop.f32.mrf.mxu0
    %v1424 = vadd.f32 0.0, %v1423
    %v1425 = vpop.f32.mrf.mxu0
    %1426 = vdwg.mxu0
    %v1427 = vadd.f32 %v931, %v1365
    %v1428 = vadd.f32 %v934, %v1368
    %v1429 = vadd.f32 %v939, %v1373
    %v1430 = vadd.f32 %v942, %v1376
    %v1431 = vadd.f32 %v947, %v1381
    %v1432 = vadd.f32 %v950, %v1384
    %v1433 = vadd.f32 %v955, %v1389
    %v1434 = vadd.f32 %v958, %v1392
    %v1435 = vadd.f32 %v963, %v1397
    %v1436 = vadd.f32 %v966, %v1400
    %v1437 = vadd.f32 %v971, %v1405
    %v1438 = vadd.f32 %v974, %v1408
    %v1439 = vadd.f32 %v979, %v1413
    %v1440 = vadd.f32 %v982, %v1416
    %v1441 = vadd.f32 %v987, %v1421
    %v1442 = vadd.f32 %v990, %v1424
    %v1443 = vld [vmem:[#allocation2 + $0x18] sm:$0xff]
    %v1444 = vld [vmem:[#allocation2 + $0x50] sm:$0xff]
    %v1445 = vld [vmem:[#allocation2 + $0x88] sm:$0xff]
    %v1446 = vld [vmem:[#allocation2 + $0xc0] sm:$0xff]
    %v1447 = vld [vmem:[#allocation2 + $0xf8] sm:$0xff]
    %v1448 = vld [vmem:[#allocation2 + $0x130] sm:$0xff]
    %v1449 = vld [vmem:[#allocation2 + $0x168] sm:$0xff]
    %v1450 = vld [vmem:[#allocation2 + $0x1a0] sm:$0xff]
    %v1459 = vunpack.c.l.b16 %v1443
    %v1460 = vunpack.c.h.b16 %v1443
    %v1461 = vunpack.c.l.b16 %v1444
    %v1462 = vunpack.c.h.b16 %v1444
    %v1463 = vunpack.c.l.b16 %v1445
    %v1464 = vunpack.c.h.b16 %v1445
    %v1465 = vunpack.c.l.b16 %v1446
    %v1466 = vunpack.c.h.b16 %v1446
    %v1467 = vunpack.c.l.b16 %v1447
    %v1468 = vunpack.c.h.b16 %v1447
    %v1469 = vunpack.c.l.b16 %v1448
    %v1470 = vunpack.c.h.b16 %v1448
    %v1471 = vunpack.c.l.b16 %v1449
    %v1472 = vunpack.c.h.b16 %v1449
    %v1473 = vunpack.c.l.b16 %v1450
    %v1474 = vunpack.c.h.b16 %v1450
    %v1475 = vpack.c.b16 %v1461, %v1459
    %v1476 = vpack.c.b16 %v1462, %v1460
    %v1477 = vpack.c.b16 %v1465, %v1463
    %v1478 = vpack.c.b16 %v1466, %v1464
    %v1479 = vpack.c.b16 %v1469, %v1467
    %v1480 = vpack.c.b16 %v1470, %v1468
    %v1481 = vpack.c.b16 %v1473, %v1471
    %v1482 = vpack.c.b16 %v1474, %v1472
    %1491 = vmatprep.subr.bf16.mxu0 0
    %1492 = vmatpush1.bf16.msra.mxu0 0
    %1493 = vmatprep.subr.bf16.mxu0 0
    %1494 = vmatpush1.bf16.msra.mxu0 0
    %1495 = vmatprep.subr.bf16.mxu0 0
    %1496 = vmatpush1.bf16.msra.mxu0 0
    %1497 = vmatprep.subr.bf16.mxu0 0
    %1498 = vmatpush1.bf16.msra.mxu0 0
    %1499 = vmatprep.subr.bf16.mxu0 %v1482
    %1500 = vmatpush1.bf16.msra.mxu0 %v1481
    %1501 = vmatprep.subr.bf16.mxu0 %v1480
    %1502 = vmatpush1.bf16.msra.mxu0 %v1479
    %1503 = vmatprep.subr.bf16.mxu0 %v1478
    %1504 = vmatpush1.bf16.msra.mxu0 %v1477
    %1505 = vmatprep.subr.bf16.mxu0 %v1476
    %1506 = vmatpush1.bf16.msra.mxu0 %v1475
    %1507 = vmatprep.subr.bf16.mxu0 0
    %1508 = vmatpush2.bf16.msra.mxu0 0
    %1509 = vmatprep.subr.bf16.mxu0 0
    %1510 = vmatpush2.bf16.msra.mxu0 0
    %1511 = vmatprep.subr.bf16.mxu0 0
    %1512 = vmatpush2.bf16.msra.mxu0 0
    %1513 = vmatprep.subr.bf16.mxu0 0
    %1514 = vmatpush2.bf16.msra.mxu0 0
    %1515 = vmatprep.subr.bf16.mxu0 0
    %1516 = vmatpush2.bf16.msra.mxu0 0
    %1517 = vmatprep.subr.bf16.mxu0 0
    %1518 = vmatpush2.bf16.msra.mxu0 0
    %1519 = vmatprep.subr.bf16.mxu0 0
    %1520 = vmatpush2.bf16.msra.mxu0 0
    %1521 = vmatprep.subr.bf16.mxu0 0
    %1522 = vmatpush2.bf16.msra.mxu0 0
    %1523 = vmatprep.mubr.bf16.mxu0 0
    %1524 = vmatmul.mubr.bf16.gmra.mxu0 %v150
    %v1525 = vpop.f32.mrf.mxu0
    %v1526 = vadd.f32 0.0, %v1525
    %v1527 = vpop.f32.mrf.mxu0
    %v1528 = vadd.f32 0.0, %v1527
    %v1529 = vpop.f32.mrf.mxu0
    %v1530 = vadd.f32 0.0, %v1529
    %v1531 = vpop.f32.mrf.mxu0
    %v1532 = vadd.f32 0.0, %v1531
    %1533 = vmatprep.mubr.bf16.mxu0 0
    %1534 = vmatmul.mubr.bf16.gmra.mxu0 %v153
    %v1535 = vpop.f32.mrf.mxu0
    %v1536 = vadd.f32 0.0, %v1535
    %v1537 = vpop.f32.mrf.mxu0
    %v1538 = vadd.f32 0.0, %v1537
    %v1539 = vpop.f32.mrf.mxu0
    %v1540 = vadd.f32 0.0, %v1539
    %v1541 = vpop.f32.mrf.mxu0
    %v1542 = vadd.f32 0.0, %v1541
    %1543 = vmatprep.mubr.bf16.mxu0 0
    %1544 = vmatmul.mubr.bf16.gmra.mxu0 %v156
    %v1545 = vpop.f32.mrf.mxu0
    %v1546 = vadd.f32 0.0, %v1545
    %v1547 = vpop.f32.mrf.mxu0
    %v1548 = vadd.f32 0.0, %v1547
    %v1549 = vpop.f32.mrf.mxu0
    %v1550 = vadd.f32 0.0, %v1549
    %v1551 = vpop.f32.mrf.mxu0
    %v1552 = vadd.f32 0.0, %v1551
    %1553 = vmatprep.mubr.bf16.mxu0 0
    %1554 = vmatmul.mubr.bf16.gmra.mxu0 %v159
    %v1555 = vpop.f32.mrf.mxu0
    %v1556 = vadd.f32 0.0, %v1555
    %v1557 = vpop.f32.mrf.mxu0
    %v1558 = vadd.f32 0.0, %v1557
    %v1559 = vpop.f32.mrf.mxu0
    %v1560 = vadd.f32 0.0, %v1559
    %v1561 = vpop.f32.mrf.mxu0
    %v1562 = vadd.f32 0.0, %v1561
    %1563 = vmatprep.mubr.bf16.mxu0 0
    %1564 = vmatmul.mubr.bf16.gmra.mxu0 %v162
    %v1565 = vpop.f32.mrf.mxu0
    %v1566 = vadd.f32 0.0, %v1565
    %v1567 = vpop.f32.mrf.mxu0
    %v1568 = vadd.f32 0.0, %v1567
    %v1569 = vpop.f32.mrf.mxu0
    %v1570 = vadd.f32 0.0, %v1569
    %v1571 = vpop.f32.mrf.mxu0
    %v1572 = vadd.f32 0.0, %v1571
    %1573 = vmatprep.mubr.bf16.mxu0 0
    %1574 = vmatmul.mubr.bf16.gmra.mxu0 %v165
    %v1575 = vpop.f32.mrf.mxu0
    %v1576 = vadd.f32 0.0, %v1575
    %v1577 = vpop.f32.mrf.mxu0
    %v1578 = vadd.f32 0.0, %v1577
    %v1579 = vpop.f32.mrf.mxu0
    %v1580 = vadd.f32 0.0, %v1579
    %v1581 = vpop.f32.mrf.mxu0
    %v1582 = vadd.f32 0.0, %v1581
    %1583 = vmatprep.mubr.bf16.mxu0 0
    %1584 = vmatmul.mubr.bf16.gmra.mxu0 %v168
    %v1585 = vpop.f32.mrf.mxu0
    %v1586 = vadd.f32 0.0, %v1585
    %v1587 = vpop.f32.mrf.mxu0
    %v1588 = vadd.f32 0.0, %v1587
    %v1589 = vpop.f32.mrf.mxu0
    %v1590 = vadd.f32 0.0, %v1589
    %v1591 = vpop.f32.mrf.mxu0
    %v1592 = vadd.f32 0.0, %v1591
    %1593 = vmatprep.mubr.bf16.mxu0 0
    %1594 = vmatmul.mubr.bf16.gmra.mxu0 %v171
    %v1595 = vpop.f32.mrf.mxu0
    %v1596 = vadd.f32 0.0, %v1595
    %v1597 = vpop.f32.mrf.mxu0
    %v1598 = vadd.f32 0.0, %v1597
    %v1599 = vpop.f32.mrf.mxu0
    %v1600 = vadd.f32 0.0, %v1599
    %v1601 = vpop.f32.mrf.mxu0
    %v1602 = vadd.f32 0.0, %v1601
    %1603 = vdwg.mxu0
    %v1604 = vmax.f32 %v1526, 0.0
    %v1605 = vmax.f32 %v1528, 0.0
    %v1606 = vmax.f32 %v1530, 0.0
    %v1607 = vmax.f32 %v1532, 0.0
    %v1608 = vmax.f32 %v1536, 0.0
    %v1609 = vmax.f32 %v1538, 0.0
    %v1610 = vmax.f32 %v1540, 0.0
    %v1611 = vmax.f32 %v1542, 0.0
    %v1612 = vmax.f32 %v1546, 0.0
    %v1613 = vmax.f32 %v1548, 0.0
    %v1614 = vmax.f32 %v1550, 0.0
    %v1615 = vmax.f32 %v1552, 0.0
    %v1616 = vmax.f32 %v1556, 0.0
    %v1617 = vmax.f32 %v1558, 0.0
    %v1618 = vmax.f32 %v1560, 0.0
    %v1619 = vmax.f32 %v1562, 0.0
    %v1620 = vmax.f32 %v1566, 0.0
    %v1621 = vmax.f32 %v1568, 0.0
    %v1622 = vmax.f32 %v1570, 0.0
    %v1623 = vmax.f32 %v1572, 0.0
    %v1624 = vmax.f32 %v1576, 0.0
    %v1625 = vmax.f32 %v1578, 0.0
    %v1626 = vmax.f32 %v1580, 0.0
    %v1627 = vmax.f32 %v1582, 0.0
    %v1628 = vmax.f32 %v1586, 0.0
    %v1629 = vmax.f32 %v1588, 0.0
    %v1630 = vmax.f32 %v1590, 0.0
    %v1631 = vmax.f32 %v1592, 0.0
    %v1632 = vmax.f32 %v1596, 0.0
    %v1633 = vmax.f32 %v1598, 0.0
    %v1634 = vmax.f32 %v1600, 0.0
    %v1635 = vmax.f32 %v1602, 0.0
    %v1636 = vpack.c.bf16 %v1606, %v1604
    %v1637 = vpack.c.bf16 %v1607, %v1605
    %v1638 = vpack.c.bf16 %v1610, %v1608
    %v1639 = vpack.c.bf16 %v1611, %v1609
    %v1640 = vpack.c.bf16 %v1614, %v1612
    %v1641 = vpack.c.bf16 %v1615, %v1613
    %v1642 = vpack.c.bf16 %v1618, %v1616
    %v1643 = vpack.c.bf16 %v1619, %v1617
    %v1644 = vpack.c.bf16 %v1622, %v1620
    %v1645 = vpack.c.bf16 %v1623, %v1621
    %v1646 = vpack.c.bf16 %v1626, %v1624
    %v1647 = vpack.c.bf16 %v1627, %v1625
    %v1648 = vpack.c.bf16 %v1630, %v1628
    %v1649 = vpack.c.bf16 %v1631, %v1629
    %v1650 = vpack.c.bf16 %v1634, %v1632
    %v1651 = vpack.c.bf16 %v1635, %v1633
    %v1652 = vld [vmem:[#allocation5 + $0x180] sm:$0xf]
    %v1653 = vld [vmem:[#allocation5 + $0x184] sm:$0xf]
    %v1654 = vld [vmem:[#allocation5 + $0x188] sm:$0xf]
    %v1655 = vld [vmem:[#allocation5 + $0x18c] sm:$0xf]
    %v1656 = vld [vmem:[#allocation5 + $0x190] sm:$0xf]
    %v1657 = vld [vmem:[#allocation5 + $0x194] sm:$0xf]
    %v1658 = vld [vmem:[#allocation5 + $0x198] sm:$0xf]
    %v1659 = vld [vmem:[#allocation5 + $0x19c] sm:$0xf]
    %v1660 = vld [vmem:[#allocation5 + $0x1a0] sm:$0xf]
    %v1661 = vld [vmem:[#allocation5 + $0x1a4] sm:$0xf]
    %v1662 = vld [vmem:[#allocation5 + $0x1a8] sm:$0xf]
    %v1663 = vld [vmem:[#allocation5 + $0x1ac] sm:$0xf]
    %v1664 = vld [vmem:[#allocation5 + $0x1b0] sm:$0xf]
    %v1665 = vld [vmem:[#allocation5 + $0x1b4] sm:$0xf]
    %v1666 = vld [vmem:[#allocation5 + $0x1b8] sm:$0xf]
    %v1667 = vld [vmem:[#allocation5 + $0x1bc] sm:$0xf]
    %v1668 = vld [vmem:[#allocation5 + $0x1c0] sm:$0xf]
    %v1669 = vld [vmem:[#allocation5 + $0x1c4] sm:$0xf]
    %v1670 = vld [vmem:[#allocation5 + $0x1c8] sm:$0xf]
    %v1671 = vld [vmem:[#allocation5 + $0x1cc] sm:$0xf]
    %v1672 = vld [vmem:[#allocation5 + $0x1d0] sm:$0xf]
    %v1673 = vld [vmem:[#allocation5 + $0x1d4] sm:$0xf]
    %v1674 = vld [vmem:[#allocation5 + $0x1d8] sm:$0xf]
    %v1675 = vld [vmem:[#allocation5 + $0x1dc] sm:$0xf]
    %v1676 = vld [vmem:[#allocation5 + $0x1e0] sm:$0xf]
    %v1677 = vld [vmem:[#allocation5 + $0x1e4] sm:$0xf]
    %v1678 = vld [vmem:[#allocation5 + $0x1e8] sm:$0xf]
    %v1679 = vld [vmem:[#allocation5 + $0x1ec] sm:$0xf]
    %v1680 = vld [vmem:[#allocation5 + $0x1f0] sm:$0xf]
    %v1681 = vld [vmem:[#allocation5 + $0x1f4] sm:$0xf]
    %v1682 = vld [vmem:[#allocation5 + $0x1f8] sm:$0xf]
    %v1683 = vld [vmem:[#allocation5 + $0x1fc] sm:$0xf]
    %v1716 = vunpack.c.l.b16 %v1652
    %v1717 = vunpack.c.l.b16 %v1653
    %v1718 = vunpack.c.l.b16 %v1654
    %v1719 = vunpack.c.l.b16 %v1655
    %v1720 = vunpack.c.l.b16 %v1656
    %v1721 = vunpack.c.l.b16 %v1657
    %v1722 = vunpack.c.l.b16 %v1658
    %v1723 = vunpack.c.l.b16 %v1659
    %v1724 = vunpack.c.l.b16 %v1660
    %v1725 = vunpack.c.l.b16 %v1661
    %v1726 = vunpack.c.l.b16 %v1662
    %v1727 = vunpack.c.l.b16 %v1663
    %v1728 = vunpack.c.l.b16 %v1664
    %v1729 = vunpack.c.l.b16 %v1665
    %v1730 = vunpack.c.l.b16 %v1666
    %v1731 = vunpack.c.l.b16 %v1667
    %v1732 = vunpack.c.l.b16 %v1668
    %v1733 = vunpack.c.l.b16 %v1669
    %v1734 = vunpack.c.l.b16 %v1670
    %v1735 = vunpack.c.l.b16 %v1671
    %v1736 = vunpack.c.l.b16 %v1672
    %v1737 = vunpack.c.l.b16 %v1673
    %v1738 = vunpack.c.l.b16 %v1674
    %v1739 = vunpack.c.l.b16 %v1675
    %v1740 = vunpack.c.l.b16 %v1676
    %v1741 = vunpack.c.l.b16 %v1677
    %v1742 = vunpack.c.l.b16 %v1678
    %v1743 = vunpack.c.l.b16 %v1679
    %v1744 = vunpack.c.l.b16 %v1680
    %v1745 = vunpack.c.l.b16 %v1681
    %v1746 = vunpack.c.l.b16 %v1682
    %v1747 = vunpack.c.l.b16 %v1683
    %v1748 = vpack.c.b16 %v1717, %v1716
    %v1749 = vpack.c.b16 %v1719, %v1718
    %v1750 = vpack.c.b16 %v1721, %v1720
    %v1751 = vpack.c.b16 %v1723, %v1722
    %v1752 = vpack.c.b16 %v1725, %v1724
    %v1753 = vpack.c.b16 %v1727, %v1726
    %v1754 = vpack.c.b16 %v1729, %v1728
    %v1755 = vpack.c.b16 %v1731, %v1730
    %v1756 = vpack.c.b16 %v1733, %v1732
    %v1757 = vpack.c.b16 %v1735, %v1734
    %v1758 = vpack.c.b16 %v1737, %v1736
    %v1759 = vpack.c.b16 %v1739, %v1738
    %v1760 = vpack.c.b16 %v1741, %v1740
    %v1761 = vpack.c.b16 %v1743, %v1742
    %v1762 = vpack.c.b16 %v1745, %v1744
    %v1763 = vpack.c.b16 %v1747, %v1746
    %1780 = vmatprep.subr.bf16.mxu0 0
    %1781 = vmatpush1.bf16.msra.mxu0 %v1755
    %1782 = vmatprep.subr.bf16.mxu0 0
    %1783 = vmatpush1.bf16.msra.mxu0 %v1754
    %1784 = vmatprep.subr.bf16.mxu0 0
    %1785 = vmatpush1.bf16.msra.mxu0 %v1753
    %1786 = vmatprep.subr.bf16.mxu0 0
    %1787 = vmatpush1.bf16.msra.mxu0 %v1752
    %1788 = vmatprep.subr.bf16.mxu0 0
    %1789 = vmatpush1.bf16.msra.mxu0 %v1751
    %1790 = vmatprep.subr.bf16.mxu0 0
    %1791 = vmatpush1.bf16.msra.mxu0 %v1750
    %1792 = vmatprep.subr.bf16.mxu0 0
    %1793 = vmatpush1.bf16.msra.mxu0 %v1749
    %1794 = vmatprep.subr.bf16.mxu0 0
    %1795 = vmatpush1.bf16.msra.mxu0 %v1748
    %1796 = vmatprep.subr.bf16.mxu0 0
    %1797 = vmatpush2.bf16.msra.mxu0 %v1763
    %1798 = vmatprep.subr.bf16.mxu0 0
    %1799 = vmatpush2.bf16.msra.mxu0 %v1762
    %1800 = vmatprep.subr.bf16.mxu0 0
    %1801 = vmatpush2.bf16.msra.mxu0 %v1761
    %1802 = vmatprep.subr.bf16.mxu0 0
    %1803 = vmatpush2.bf16.msra.mxu0 %v1760
    %1804 = vmatprep.subr.bf16.mxu0 0
    %1805 = vmatpush2.bf16.msra.mxu0 %v1759
    %1806 = vmatprep.subr.bf16.mxu0 0
    %1807 = vmatpush2.bf16.msra.mxu0 %v1758
    %1808 = vmatprep.subr.bf16.mxu0 0
    %1809 = vmatpush2.bf16.msra.mxu0 %v1757
    %1810 = vmatprep.subr.bf16.mxu0 0
    %1811 = vmatpush2.bf16.msra.mxu0 %v1756
    %1812 = vmatprep.mubr.bf16.mxu0 %v1637
    %1813 = vmatmul.mubr.bf16.gmra.mxu0 %v1636
    %v1814 = vpop.f32.mrf.mxu0
    %v1815 = vadd.f32 0.0, %v1814
    %v1816 = vpop.f32.mrf.mxu0
    %v1817 = vpop.f32.mrf.mxu0
    %v1818 = vadd.f32 0.0, %v1817
    %v1819 = vpop.f32.mrf.mxu0
    %1820 = vmatprep.mubr.bf16.mxu0 %v1639
    %1821 = vmatmul.mubr.bf16.gmra.mxu0 %v1638
    %v1822 = vpop.f32.mrf.mxu0
    %v1823 = vadd.f32 0.0, %v1822
    %v1824 = vpop.f32.mrf.mxu0
    %v1825 = vpop.f32.mrf.mxu0
    %v1826 = vadd.f32 0.0, %v1825
    %v1827 = vpop.f32.mrf.mxu0
    %1828 = vmatprep.mubr.bf16.mxu0 %v1641
    %1829 = vmatmul.mubr.bf16.gmra.mxu0 %v1640
    %v1830 = vpop.f32.mrf.mxu0
    %v1831 = vadd.f32 0.0, %v1830
    %v1832 = vpop.f32.mrf.mxu0
    %v1833 = vpop.f32.mrf.mxu0
    %v1834 = vadd.f32 0.0, %v1833
    %v1835 = vpop.f32.mrf.mxu0
    %1836 = vmatprep.mubr.bf16.mxu0 %v1643
    %1837 = vmatmul.mubr.bf16.gmra.mxu0 %v1642
    %v1838 = vpop.f32.mrf.mxu0
    %v1839 = vadd.f32 0.0, %v1838
    %v1840 = vpop.f32.mrf.mxu0
    %v1841 = vpop.f32.mrf.mxu0
    %v1842 = vadd.f32 0.0, %v1841
    %v1843 = vpop.f32.mrf.mxu0
    %1844 = vmatprep.mubr.bf16.mxu0 %v1645
    %1845 = vmatmul.mubr.bf16.gmra.mxu0 %v1644
    %v1846 = vpop.f32.mrf.mxu0
    %v1847 = vadd.f32 0.0, %v1846
    %v1848 = vpop.f32.mrf.mxu0
    %v1849 = vpop.f32.mrf.mxu0
    %v1850 = vadd.f32 0.0, %v1849
    %v1851 = vpop.f32.mrf.mxu0
    %1852 = vmatprep.mubr.bf16.mxu0 %v1647
    %1853 = vmatmul.mubr.bf16.gmra.mxu0 %v1646
    %v1854 = vpop.f32.mrf.mxu0
    %v1855 = vadd.f32 0.0, %v1854
    %v1856 = vpop.f32.mrf.mxu0
    %v1857 = vpop.f32.mrf.mxu0
    %v1858 = vadd.f32 0.0, %v1857
    %v1859 = vpop.f32.mrf.mxu0
    %1860 = vmatprep.mubr.bf16.mxu0 %v1649
    %1861 = vmatmul.mubr.bf16.gmra.mxu0 %v1648
    %v1862 = vpop.f32.mrf.mxu0
    %v1863 = vadd.f32 0.0, %v1862
    %v1864 = vpop.f32.mrf.mxu0
    %v1865 = vpop.f32.mrf.mxu0
    %v1866 = vadd.f32 0.0, %v1865
    %v1867 = vpop.f32.mrf.mxu0
    %1868 = vmatprep.mubr.bf16.mxu0 %v1651
    %1869 = vmatmul.mubr.bf16.gmra.mxu0 %v1650
    %v1870 = vpop.f32.mrf.mxu0
    %v1871 = vadd.f32 0.0, %v1870
    %v1872 = vpop.f32.mrf.mxu0
    %v1873 = vpop.f32.mrf.mxu0
    %v1874 = vadd.f32 0.0, %v1873
    %v1875 = vpop.f32.mrf.mxu0
    %1876 = vdwg.mxu0
    %v1877 = vadd.f32 %v1427, %v1815
    %v1878 = vadd.f32 %v1428, %v1818
    %v1879 = vadd.f32 %v1429, %v1823
    %v1880 = vadd.f32 %v1430, %v1826
    %v1881 = vadd.f32 %v1431, %v1831
    %v1882 = vadd.f32 %v1432, %v1834
    %v1883 = vadd.f32 %v1433, %v1839
    %v1884 = vadd.f32 %v1434, %v1842
    %v1885 = vadd.f32 %v1435, %v1847
    %v1886 = vadd.f32 %v1436, %v1850
    %v1887 = vadd.f32 %v1437, %v1855
    %v1888 = vadd.f32 %v1438, %v1858
    %v1889 = vadd.f32 %v1439, %v1863
    %v1890 = vadd.f32 %v1440, %v1866
    %v1891 = vadd.f32 %v1441, %v1871
    %v1892 = vadd.f32 %v1442, %v1874
    %v1893 = vld [vmem:[#allocation2 + $0x20] sm:$0xff]
    %v1894 = vld [vmem:[#allocation2 + $0x58] sm:$0xff]
    %v1895 = vld [vmem:[#allocation2 + $0x90] sm:$0xff]
    %v1896 = vld [vmem:[#allocation2 + $0xc8] sm:$0xff]
    %v1897 = vld [vmem:[#allocation2 + $0x100] sm:$0xff]
    %v1898 = vld [vmem:[#allocation2 + $0x138] sm:$0xff]
    %v1899 = vld [vmem:[#allocation2 + $0x170] sm:$0xff]
    %v1900 = vld [vmem:[#allocation2 + $0x1a8] sm:$0xff]
    %v1909 = vunpack.c.l.b16 %v1893
    %v1910 = vunpack.c.h.b16 %v1893
    %v1911 = vunpack.c.l.b16 %v1894
    %v1912 = vunpack.c.h.b16 %v1894
    %v1913 = vunpack.c.l.b16 %v1895
    %v1914 = vunpack.c.h.b16 %v1895
    %v1915 = vunpack.c.l.b16 %v1896
    %v1916 = vunpack.c.h.b16 %v1896
    %v1917 = vunpack.c.l.b16 %v1897
    %v1918 = vunpack.c.h.b16 %v1897
    %v1919 = vunpack.c.l.b16 %v1898
    %v1920 = vunpack.c.h.b16 %v1898
    %v1921 = vunpack.c.l.b16 %v1899
    %v1922 = vunpack.c.h.b16 %v1899
    %v1923 = vunpack.c.l.b16 %v1900
    %v1924 = vunpack.c.h.b16 %v1900
    %v1925 = vpack.c.b16 %v1911, %v1909
    %v1926 = vpack.c.b16 %v1912, %v1910
    %v1927 = vpack.c.b16 %v1915, %v1913
    %v1928 = vpack.c.b16 %v1916, %v1914
    %v1929 = vpack.c.b16 %v1919, %v1917
    %v1930 = vpack.c.b16 %v1920, %v1918
    %v1931 = vpack.c.b16 %v1923, %v1921
    %v1932 = vpack.c.b16 %v1924, %v1922
    %1941 = vmatprep.subr.bf16.mxu0 0
    %1942 = vmatpush1.bf16.msra.mxu0 0
    %1943 = vmatprep.subr.bf16.mxu0 0
    %1944 = vmatpush1.bf16.msra.mxu0 0
    %1945 = vmatprep.subr.bf16.mxu0 0
    %1946 = vmatpush1.bf16.msra.mxu0 0
    %1947 = vmatprep.subr.bf16.mxu0 0
    %1948 = vmatpush1.bf16.msra.mxu0 0
    %1949 = vmatprep.subr.bf16.mxu0 %v1932
    %1950 = vmatpush1.bf16.msra.mxu0 %v1931
    %1951 = vmatprep.subr.bf16.mxu0 %v1930
    %1952 = vmatpush1.bf16.msra.mxu0 %v1929
    %1953 = vmatprep.subr.bf16.mxu0 %v1928
    %1954 = vmatpush1.bf16.msra.mxu0 %v1927
    %1955 = vmatprep.subr.bf16.mxu0 %v1926
    %1956 = vmatpush1.bf16.msra.mxu0 %v1925
    %1957 = vmatprep.subr.bf16.mxu0 0
    %1958 = vmatpush2.bf16.msra.mxu0 0
    %1959 = vmatprep.subr.bf16.mxu0 0
    %1960 = vmatpush2.bf16.msra.mxu0 0
    %1961 = vmatprep.subr.bf16.mxu0 0
    %1962 = vmatpush2.bf16.msra.mxu0 0
    %1963 = vmatprep.subr.bf16.mxu0 0
    %1964 = vmatpush2.bf16.msra.mxu0 0
    %1965 = vmatprep.subr.bf16.mxu0 0
    %1966 = vmatpush2.bf16.msra.mxu0 0
    %1967 = vmatprep.subr.bf16.mxu0 0
    %1968 = vmatpush2.bf16.msra.mxu0 0
    %1969 = vmatprep.subr.bf16.mxu0 0
    %1970 = vmatpush2.bf16.msra.mxu0 0
    %1971 = vmatprep.subr.bf16.mxu0 0
    %1972 = vmatpush2.bf16.msra.mxu0 0
    %1973 = vmatprep.mubr.bf16.mxu0 0
    %1974 = vmatmul.mubr.bf16.gmra.mxu0 %v150
    %v1975 = vpop.f32.mrf.mxu0
    %v1976 = vadd.f32 0.0, %v1975
    %v1977 = vpop.f32.mrf.mxu0
    %v1978 = vadd.f32 0.0, %v1977
    %v1979 = vpop.f32.mrf.mxu0
    %v1980 = vadd.f32 0.0, %v1979
    %v1981 = vpop.f32.mrf.mxu0
    %v1982 = vadd.f32 0.0, %v1981
    %1983 = vmatprep.mubr.bf16.mxu0 0
    %1984 = vmatmul.mubr.bf16.gmra.mxu0 %v153
    %v1985 = vpop.f32.mrf.mxu0
    %v1986 = vadd.f32 0.0, %v1985
    %v1987 = vpop.f32.mrf.mxu0
    %v1988 = vadd.f32 0.0, %v1987
    %v1989 = vpop.f32.mrf.mxu0
    %v1990 = vadd.f32 0.0, %v1989
    %v1991 = vpop.f32.mrf.mxu0
    %v1992 = vadd.f32 0.0, %v1991
    %1993 = vmatprep.mubr.bf16.mxu0 0
    %1994 = vmatmul.mubr.bf16.gmra.mxu0 %v156
    %v1995 = vpop.f32.mrf.mxu0
    %v1996 = vadd.f32 0.0, %v1995
    %v1997 = vpop.f32.mrf.mxu0
    %v1998 = vadd.f32 0.0, %v1997
    %v1999 = vpop.f32.mrf.mxu0
    %v2000 = vadd.f32 0.0, %v1999
    %v2001 = vpop.f32.mrf.mxu0
    %v2002 = vadd.f32 0.0, %v2001
    %2003 = vmatprep.mubr.bf16.mxu0 0
    %2004 = vmatmul.mubr.bf16.gmra.mxu0 %v159
    %v2005 = vpop.f32.mrf.mxu0
    %v2006 = vadd.f32 0.0, %v2005
    %v2007 = vpop.f32.mrf.mxu0
    %v2008 = vadd.f32 0.0, %v2007
    %v2009 = vpop.f32.mrf.mxu0
    %v2010 = vadd.f32 0.0, %v2009
    %v2011 = vpop.f32.mrf.mxu0
    %v2012 = vadd.f32 0.0, %v2011
    %2013 = vmatprep.mubr.bf16.mxu0 0
    %2014 = vmatmul.mubr.bf16.gmra.mxu0 %v162
    %v2015 = vpop.f32.mrf.mxu0
    %v2016 = vadd.f32 0.0, %v2015
    %v2017 = vpop.f32.mrf.mxu0
    %v2018 = vadd.f32 0.0, %v2017
    %v2019 = vpop.f32.mrf.mxu0
    %v2020 = vadd.f32 0.0, %v2019
    %v2021 = vpop.f32.mrf.mxu0
    %v2022 = vadd.f32 0.0, %v2021
    %2023 = vmatprep.mubr.bf16.mxu0 0
    %2024 = vmatmul.mubr.bf16.gmra.mxu0 %v165
    %v2025 = vpop.f32.mrf.mxu0
    %v2026 = vadd.f32 0.0, %v2025
    %v2027 = vpop.f32.mrf.mxu0
    %v2028 = vadd.f32 0.0, %v2027
    %v2029 = vpop.f32.mrf.mxu0
    %v2030 = vadd.f32 0.0, %v2029
    %v2031 = vpop.f32.mrf.mxu0
    %v2032 = vadd.f32 0.0, %v2031
    %2033 = vmatprep.mubr.bf16.mxu0 0
    %2034 = vmatmul.mubr.bf16.gmra.mxu0 %v168
    %v2035 = vpop.f32.mrf.mxu0
    %v2036 = vadd.f32 0.0, %v2035
    %v2037 = vpop.f32.mrf.mxu0
    %v2038 = vadd.f32 0.0, %v2037
    %v2039 = vpop.f32.mrf.mxu0
    %v2040 = vadd.f32 0.0, %v2039
    %v2041 = vpop.f32.mrf.mxu0
    %v2042 = vadd.f32 0.0, %v2041
    %2043 = vmatprep.mubr.bf16.mxu0 0
    %2044 = vmatmul.mubr.bf16.gmra.mxu0 %v171
    %v2045 = vpop.f32.mrf.mxu0
    %v2046 = vadd.f32 0.0, %v2045
    %v2047 = vpop.f32.mrf.mxu0
    %v2048 = vadd.f32 0.0, %v2047
    %v2049 = vpop.f32.mrf.mxu0
    %v2050 = vadd.f32 0.0, %v2049
    %v2051 = vpop.f32.mrf.mxu0
    %v2052 = vadd.f32 0.0, %v2051
    %2053 = vdwg.mxu0
    %v2054 = vmax.f32 %v1976, 0.0
    %v2055 = vmax.f32 %v1978, 0.0
    %v2056 = vmax.f32 %v1980, 0.0
    %v2057 = vmax.f32 %v1982, 0.0
    %v2058 = vmax.f32 %v1986, 0.0
    %v2059 = vmax.f32 %v1988, 0.0
    %v2060 = vmax.f32 %v1990, 0.0
    %v2061 = vmax.f32 %v1992, 0.0
    %v2062 = vmax.f32 %v1996, 0.0
    %v2063 = vmax.f32 %v1998, 0.0
    %v2064 = vmax.f32 %v2000, 0.0
    %v2065 = vmax.f32 %v2002, 0.0
    %v2066 = vmax.f32 %v2006, 0.0
    %v2067 = vmax.f32 %v2008, 0.0
    %v2068 = vmax.f32 %v2010, 0.0
    %v2069 = vmax.f32 %v2012, 0.0
    %v2070 = vmax.f32 %v2016, 0.0
    %v2071 = vmax.f32 %v2018, 0.0
    %v2072 = vmax.f32 %v2020, 0.0
    %v2073 = vmax.f32 %v2022, 0.0
    %v2074 = vmax.f32 %v2026, 0.0
    %v2075 = vmax.f32 %v2028, 0.0
    %v2076 = vmax.f32 %v2030, 0.0
    %v2077 = vmax.f32 %v2032, 0.0
    %v2078 = vmax.f32 %v2036, 0.0
    %v2079 = vmax.f32 %v2038, 0.0
    %v2080 = vmax.f32 %v2040, 0.0
    %v2081 = vmax.f32 %v2042, 0.0
    %v2082 = vmax.f32 %v2046, 0.0
    %v2083 = vmax.f32 %v2048, 0.0
    %v2084 = vmax.f32 %v2050, 0.0
    %v2085 = vmax.f32 %v2052, 0.0
    %v2086 = vpack.c.bf16 %v2056, %v2054
    %v2087 = vpack.c.bf16 %v2057, %v2055
    %v2088 = vpack.c.bf16 %v2060, %v2058
    %v2089 = vpack.c.bf16 %v2061, %v2059
    %v2090 = vpack.c.bf16 %v2064, %v2062
    %v2091 = vpack.c.bf16 %v2065, %v2063
    %v2092 = vpack.c.bf16 %v2068, %v2066
    %v2093 = vpack.c.bf16 %v2069, %v2067
    %v2094 = vpack.c.bf16 %v2072, %v2070
    %v2095 = vpack.c.bf16 %v2073, %v2071
    %v2096 = vpack.c.bf16 %v2076, %v2074
    %v2097 = vpack.c.bf16 %v2077, %v2075
    %v2098 = vpack.c.bf16 %v2080, %v2078
    %v2099 = vpack.c.bf16 %v2081, %v2079
    %v2100 = vpack.c.bf16 %v2084, %v2082
    %v2101 = vpack.c.bf16 %v2085, %v2083
    %v2102 = vld [vmem:[#allocation5 + $0x200] sm:$0xf]
    %v2103 = vld [vmem:[#allocation5 + $0x204] sm:$0xf]
    %v2104 = vld [vmem:[#allocation5 + $0x208] sm:$0xf]
    %v2105 = vld [vmem:[#allocation5 + $0x20c] sm:$0xf]
    %v2106 = vld [vmem:[#allocation5 + $0x210] sm:$0xf]
    %v2107 = vld [vmem:[#allocation5 + $0x214] sm:$0xf]
    %v2108 = vld [vmem:[#allocation5 + $0x218] sm:$0xf]
    %v2109 = vld [vmem:[#allocation5 + $0x21c] sm:$0xf]
    %v2110 = vld [vmem:[#allocation5 + $0x220] sm:$0xf]
    %v2111 = vld [vmem:[#allocation5 + $0x224] sm:$0xf]
    %v2112 = vld [vmem:[#allocation5 + $0x228] sm:$0xf]
    %v2113 = vld [vmem:[#allocation5 + $0x22c] sm:$0xf]
    %v2114 = vld [vmem:[#allocation5 + $0x230] sm:$0xf]
    %v2115 = vld [vmem:[#allocation5 + $0x234] sm:$0xf]
    %v2116 = vld [vmem:[#allocation5 + $0x238] sm:$0xf]
    %v2117 = vld [vmem:[#allocation5 + $0x23c] sm:$0xf]
    %v2118 = vld [vmem:[#allocation5 + $0x240] sm:$0xf]
    %v2119 = vld [vmem:[#allocation5 + $0x244] sm:$0xf]
    %v2120 = vld [vmem:[#allocation5 + $0x248] sm:$0xf]
    %v2121 = vld [vmem:[#allocation5 + $0x24c] sm:$0xf]
    %v2122 = vld [vmem:[#allocation5 + $0x250] sm:$0xf]
    %v2123 = vld [vmem:[#allocation5 + $0x254] sm:$0xf]
    %v2124 = vld [vmem:[#allocation5 + $0x258] sm:$0xf]
    %v2125 = vld [vmem:[#allocation5 + $0x25c] sm:$0xf]
    %v2126 = vld [vmem:[#allocation5 + $0x260] sm:$0xf]
    %v2127 = vld [vmem:[#allocation5 + $0x264] sm:$0xf]
    %v2128 = vld [vmem:[#allocation5 + $0x268] sm:$0xf]
    %v2129 = vld [vmem:[#allocation5 + $0x26c] sm:$0xf]
    %v2130 = vld [vmem:[#allocation5 + $0x270] sm:$0xf]
    %v2131 = vld [vmem:[#allocation5 + $0x274] sm:$0xf]
    %v2132 = vld [vmem:[#allocation5 + $0x278] sm:$0xf]
    %v2133 = vld [vmem:[#allocation5 + $0x27c] sm:$0xf]
    %v2166 = vunpack.c.l.b16 %v2102
    %v2167 = vunpack.c.l.b16 %v2103
    %v2168 = vunpack.c.l.b16 %v2104
    %v2169 = vunpack.c.l.b16 %v2105
    %v2170 = vunpack.c.l.b16 %v2106
    %v2171 = vunpack.c.l.b16 %v2107
    %v2172 = vunpack.c.l.b16 %v2108
    %v2173 = vunpack.c.l.b16 %v2109
    %v2174 = vunpack.c.l.b16 %v2110
    %v2175 = vunpack.c.l.b16 %v2111
    %v2176 = vunpack.c.l.b16 %v2112
    %v2177 = vunpack.c.l.b16 %v2113
    %v2178 = vunpack.c.l.b16 %v2114
    %v2179 = vunpack.c.l.b16 %v2115
    %v2180 = vunpack.c.l.b16 %v2116
    %v2181 = vunpack.c.l.b16 %v2117
    %v2182 = vunpack.c.l.b16 %v2118
    %v2183 = vunpack.c.l.b16 %v2119
    %v2184 = vunpack.c.l.b16 %v2120
    %v2185 = vunpack.c.l.b16 %v2121
    %v2186 = vunpack.c.l.b16 %v2122
    %v2187 = vunpack.c.l.b16 %v2123
    %v2188 = vunpack.c.l.b16 %v2124
    %v2189 = vunpack.c.l.b16 %v2125
    %v2190 = vunpack.c.l.b16 %v2126
    %v2191 = vunpack.c.l.b16 %v2127
    %v2192 = vunpack.c.l.b16 %v2128
    %v2193 = vunpack.c.l.b16 %v2129
    %v2194 = vunpack.c.l.b16 %v2130
    %v2195 = vunpack.c.l.b16 %v2131
    %v2196 = vunpack.c.l.b16 %v2132
    %v2197 = vunpack.c.l.b16 %v2133
    %v2198 = vpack.c.b16 %v2167, %v2166
    %v2199 = vpack.c.b16 %v2169, %v2168
    %v2200 = vpack.c.b16 %v2171, %v2170
    %v2201 = vpack.c.b16 %v2173, %v2172
    %v2202 = vpack.c.b16 %v2175, %v2174
    %v2203 = vpack.c.b16 %v2177, %v2176
    %v2204 = vpack.c.b16 %v2179, %v2178
    %v2205 = vpack.c.b16 %v2181, %v2180
    %v2206 = vpack.c.b16 %v2183, %v2182
    %v2207 = vpack.c.b16 %v2185, %v2184
    %v2208 = vpack.c.b16 %v2187, %v2186
    %v2209 = vpack.c.b16 %v2189, %v2188
    %v2210 = vpack.c.b16 %v2191, %v2190
    %v2211 = vpack.c.b16 %v2193, %v2192
    %v2212 = vpack.c.b16 %v2195, %v2194
    %v2213 = vpack.c.b16 %v2197, %v2196
    %2230 = vmatprep.subr.bf16.mxu0 0
    %2231 = vmatpush1.bf16.msra.mxu0 %v2205
    %2232 = vmatprep.subr.bf16.mxu0 0
    %2233 = vmatpush1.bf16.msra.mxu0 %v2204
    %2234 = vmatprep.subr.bf16.mxu0 0
    %2235 = vmatpush1.bf16.msra.mxu0 %v2203
    %2236 = vmatprep.subr.bf16.mxu0 0
    %2237 = vmatpush1.bf16.msra.mxu0 %v2202
    %2238 = vmatprep.subr.bf16.mxu0 0
    %2239 = vmatpush1.bf16.msra.mxu0 %v2201
    %2240 = vmatprep.subr.bf16.mxu0 0
    %2241 = vmatpush1.bf16.msra.mxu0 %v2200
    %2242 = vmatprep.subr.bf16.mxu0 0
    %2243 = vmatpush1.bf16.msra.mxu0 %v2199
    %2244 = vmatprep.subr.bf16.mxu0 0
    %2245 = vmatpush1.bf16.msra.mxu0 %v2198
    %2246 = vmatprep.subr.bf16.mxu0 0
    %2247 = vmatpush2.bf16.msra.mxu0 %v2213
    %2248 = vmatprep.subr.bf16.mxu0 0
    %2249 = vmatpush2.bf16.msra.mxu0 %v2212
    %2250 = vmatprep.subr.bf16.mxu0 0
    %2251 = vmatpush2.bf16.msra.mxu0 %v2211
    %2252 = vmatprep.subr.bf16.mxu0 0
    %2253 = vmatpush2.bf16.msra.mxu0 %v2210
    %2254 = vmatprep.subr.bf16.mxu0 0
    %2255 = vmatpush2.bf16.msra.mxu0 %v2209
    %2256 = vmatprep.subr.bf16.mxu0 0
    %2257 = vmatpush2.bf16.msra.mxu0 %v2208
    %2258 = vmatprep.subr.bf16.mxu0 0
    %2259 = vmatpush2.bf16.msra.mxu0 %v2207
    %2260 = vmatprep.subr.bf16.mxu0 0
    %2261 = vmatpush2.bf16.msra.mxu0 %v2206
    %2262 = vmatprep.mubr.bf16.mxu0 %v2087
    %2263 = vmatmul.mubr.bf16.gmra.mxu0 %v2086
    %v2264 = vpop.f32.mrf.mxu0
    %v2265 = vadd.f32 0.0, %v2264
    %v2266 = vpop.f32.mrf.mxu0
    %v2267 = vpop.f32.mrf.mxu0
    %v2268 = vadd.f32 0.0, %v2267
    %v2269 = vpop.f32.mrf.mxu0
    %2270 = vmatprep.mubr.bf16.mxu0 %v2089
    %2271 = vmatmul.mubr.bf16.gmra.mxu0 %v2088
    %v2272 = vpop.f32.mrf.mxu0
    %v2273 = vadd.f32 0.0, %v2272
    %v2274 = vpop.f32.mrf.mxu0
    %v2275 = vpop.f32.mrf.mxu0
    %v2276 = vadd.f32 0.0, %v2275
    %v2277 = vpop.f32.mrf.mxu0
    %2278 = vmatprep.mubr.bf16.mxu0 %v2091
    %2279 = vmatmul.mubr.bf16.gmra.mxu0 %v2090
    %v2280 = vpop.f32.mrf.mxu0
    %v2281 = vadd.f32 0.0, %v2280
    %v2282 = vpop.f32.mrf.mxu0
    %v2283 = vpop.f32.mrf.mxu0
    %v2284 = vadd.f32 0.0, %v2283
    %v2285 = vpop.f32.mrf.mxu0
    %2286 = vmatprep.mubr.bf16.mxu0 %v2093
    %2287 = vmatmul.mubr.bf16.gmra.mxu0 %v2092
    %v2288 = vpop.f32.mrf.mxu0
    %v2289 = vadd.f32 0.0, %v2288
    %v2290 = vpop.f32.mrf.mxu0
    %v2291 = vpop.f32.mrf.mxu0
    %v2292 = vadd.f32 0.0, %v2291
    %v2293 = vpop.f32.mrf.mxu0
    %2294 = vmatprep.mubr.bf16.mxu0 %v2095
    %2295 = vmatmul.mubr.bf16.gmra.mxu0 %v2094
    %v2296 = vpop.f32.mrf.mxu0
    %v2297 = vadd.f32 0.0, %v2296
    %v2298 = vpop.f32.mrf.mxu0
    %v2299 = vpop.f32.mrf.mxu0
    %v2300 = vadd.f32 0.0, %v2299
    %v2301 = vpop.f32.mrf.mxu0
    %2302 = vmatprep.mubr.bf16.mxu0 %v2097
    %2303 = vmatmul.mubr.bf16.gmra.mxu0 %v2096
    %v2304 = vpop.f32.mrf.mxu0
    %v2305 = vadd.f32 0.0, %v2304
    %v2306 = vpop.f32.mrf.mxu0
    %v2307 = vpop.f32.mrf.mxu0
    %v2308 = vadd.f32 0.0, %v2307
    %v2309 = vpop.f32.mrf.mxu0
    %2310 = vmatprep.mubr.bf16.mxu0 %v2099
    %2311 = vmatmul.mubr.bf16.gmra.mxu0 %v2098
    %v2312 = vpop.f32.mrf.mxu0
    %v2313 = vadd.f32 0.0, %v2312
    %v2314 = vpop.f32.mrf.mxu0
    %v2315 = vpop.f32.mrf.mxu0
    %v2316 = vadd.f32 0.0, %v2315
    %v2317 = vpop.f32.mrf.mxu0
    %2318 = vmatprep.mubr.bf16.mxu0 %v2101
    %2319 = vmatmul.mubr.bf16.gmra.mxu0 %v2100
    %v2320 = vpop.f32.mrf.mxu0
    %v2321 = vadd.f32 0.0, %v2320
    %v2322 = vpop.f32.mrf.mxu0
    %v2323 = vpop.f32.mrf.mxu0
    %v2324 = vadd.f32 0.0, %v2323
    %v2325 = vpop.f32.mrf.mxu0
    %2326 = vdwg.mxu0
    %v2327 = vadd.f32 %v1877, %v2265
    %v2328 = vadd.f32 %v1878, %v2268
    %v2329 = vadd.f32 %v1879, %v2273
    %v2330 = vadd.f32 %v1880, %v2276
    %v2331 = vadd.f32 %v1881, %v2281
    %v2332 = vadd.f32 %v1882, %v2284
    %v2333 = vadd.f32 %v1883, %v2289
    %v2334 = vadd.f32 %v1884, %v2292
    %v2335 = vadd.f32 %v1885, %v2297
    %v2336 = vadd.f32 %v1886, %v2300
    %v2337 = vadd.f32 %v1887, %v2305
    %v2338 = vadd.f32 %v1888, %v2308
    %v2339 = vadd.f32 %v1889, %v2313
    %v2340 = vadd.f32 %v1890, %v2316
    %v2341 = vadd.f32 %v1891, %v2321
    %v2342 = vadd.f32 %v1892, %v2324
    %v2343 = vld [vmem:[#allocation2 + $0x28] sm:$0xff]
    %v2344 = vld [vmem:[#allocation2 + $0x60] sm:$0xff]
    %v2345 = vld [vmem:[#allocation2 + $0x98] sm:$0xff]
    %v2346 = vld [vmem:[#allocation2 + $0xd0] sm:$0xff]
    %v2347 = vld [vmem:[#allocation2 + $0x108] sm:$0xff]
    %v2348 = vld [vmem:[#allocation2 + $0x140] sm:$0xff]
    %v2349 = vld [vmem:[#allocation2 + $0x178] sm:$0xff]
    %v2350 = vld [vmem:[#allocation2 + $0x1b0] sm:$0xff]
    %v2359 = vunpack.c.l.b16 %v2343
    %v2360 = vunpack.c.h.b16 %v2343
    %v2361 = vunpack.c.l.b16 %v2344
    %v2362 = vunpack.c.h.b16 %v2344
    %v2363 = vunpack.c.l.b16 %v2345
    %v2364 = vunpack.c.h.b16 %v2345
    %v2365 = vunpack.c.l.b16 %v2346
    %v2366 = vunpack.c.h.b16 %v2346
    %v2367 = vunpack.c.l.b16 %v2347
    %v2368 = vunpack.c.h.b16 %v2347
    %v2369 = vunpack.c.l.b16 %v2348
    %v2370 = vunpack.c.h.b16 %v2348
    %v2371 = vunpack.c.l.b16 %v2349
    %v2372 = vunpack.c.h.b16 %v2349
    %v2373 = vunpack.c.l.b16 %v2350
    %v2374 = vunpack.c.h.b16 %v2350
    %v2375 = vpack.c.b16 %v2361, %v2359
    %v2376 = vpack.c.b16 %v2362, %v2360
    %v2377 = vpack.c.b16 %v2365, %v2363
    %v2378 = vpack.c.b16 %v2366, %v2364
    %v2379 = vpack.c.b16 %v2369, %v2367
    %v2380 = vpack.c.b16 %v2370, %v2368
    %v2381 = vpack.c.b16 %v2373, %v2371
    %v2382 = vpack.c.b16 %v2374, %v2372
    %2391 = vmatprep.subr.bf16.mxu0 0
    %2392 = vmatpush1.bf16.msra.mxu0 0
    %2393 = vmatprep.subr.bf16.mxu0 0
    %2394 = vmatpush1.bf16.msra.mxu0 0
    %2395 = vmatprep.subr.bf16.mxu0 0
    %2396 = vmatpush1.bf16.msra.mxu0 0
    %2397 = vmatprep.subr.bf16.mxu0 0
    %2398 = vmatpush1.bf16.msra.mxu0 0
    %2399 = vmatprep.subr.bf16.mxu0 %v2382
    %2400 = vmatpush1.bf16.msra.mxu0 %v2381
    %2401 = vmatprep.subr.bf16.mxu0 %v2380
    %2402 = vmatpush1.bf16.msra.mxu0 %v2379
    %2403 = vmatprep.subr.bf16.mxu0 %v2378
    %2404 = vmatpush1.bf16.msra.mxu0 %v2377
    %2405 = vmatprep.subr.bf16.mxu0 %v2376
    %2406 = vmatpush1.bf16.msra.mxu0 %v2375
    %2407 = vmatprep.subr.bf16.mxu0 0
    %2408 = vmatpush2.bf16.msra.mxu0 0
    %2409 = vmatprep.subr.bf16.mxu0 0
    %2410 = vmatpush2.bf16.msra.mxu0 0
    %2411 = vmatprep.subr.bf16.mxu0 0
    %2412 = vmatpush2.bf16.msra.mxu0 0
    %2413 = vmatprep.subr.bf16.mxu0 0
    %2414 = vmatpush2.bf16.msra.mxu0 0
    %2415 = vmatprep.subr.bf16.mxu0 0
    %2416 = vmatpush2.bf16.msra.mxu0 0
    %2417 = vmatprep.subr.bf16.mxu0 0
    %2418 = vmatpush2.bf16.msra.mxu0 0
    %2419 = vmatprep.subr.bf16.mxu0 0
    %2420 = vmatpush2.bf16.msra.mxu0 0
    %2421 = vmatprep.subr.bf16.mxu0 0
    %2422 = vmatpush2.bf16.msra.mxu0 0
    %2423 = vmatprep.mubr.bf16.mxu0 0
    %2424 = vmatmul.mubr.bf16.gmra.mxu0 %v150
    %v2425 = vpop.f32.mrf.mxu0
    %v2426 = vadd.f32 0.0, %v2425
    %v2427 = vpop.f32.mrf.mxu0
    %v2428 = vadd.f32 0.0, %v2427
    %v2429 = vpop.f32.mrf.mxu0
    %v2430 = vadd.f32 0.0, %v2429
    %v2431 = vpop.f32.mrf.mxu0
    %v2432 = vadd.f32 0.0, %v2431
    %2433 = vmatprep.mubr.bf16.mxu0 0
    %2434 = vmatmul.mubr.bf16.gmra.mxu0 %v153
    %v2435 = vpop.f32.mrf.mxu0
    %v2436 = vadd.f32 0.0, %v2435
    %v2437 = vpop.f32.mrf.mxu0
    %v2438 = vadd.f32 0.0, %v2437
    %v2439 = vpop.f32.mrf.mxu0
    %v2440 = vadd.f32 0.0, %v2439
    %v2441 = vpop.f32.mrf.mxu0
    %v2442 = vadd.f32 0.0, %v2441
    %2443 = vmatprep.mubr.bf16.mxu0 0
    %2444 = vmatmul.mubr.bf16.gmra.mxu0 %v156
    %v2445 = vpop.f32.mrf.mxu0
    %v2446 = vadd.f32 0.0, %v2445
    %v2447 = vpop.f32.mrf.mxu0
    %v2448 = vadd.f32 0.0, %v2447
    %v2449 = vpop.f32.mrf.mxu0
    %v2450 = vadd.f32 0.0, %v2449
    %v2451 = vpop.f32.mrf.mxu0
    %v2452 = vadd.f32 0.0, %v2451
    %2453 = vmatprep.mubr.bf16.mxu0 0
    %2454 = vmatmul.mubr.bf16.gmra.mxu0 %v159
    %v2455 = vpop.f32.mrf.mxu0
    %v2456 = vadd.f32 0.0, %v2455
    %v2457 = vpop.f32.mrf.mxu0
    %v2458 = vadd.f32 0.0, %v2457
    %v2459 = vpop.f32.mrf.mxu0
    %v2460 = vadd.f32 0.0, %v2459
    %v2461 = vpop.f32.mrf.mxu0
    %v2462 = vadd.f32 0.0, %v2461
    %2463 = vmatprep.mubr.bf16.mxu0 0
    %2464 = vmatmul.mubr.bf16.gmra.mxu0 %v162
    %v2465 = vpop.f32.mrf.mxu0
    %v2466 = vadd.f32 0.0, %v2465
    %v2467 = vpop.f32.mrf.mxu0
    %v2468 = vadd.f32 0.0, %v2467
    %v2469 = vpop.f32.mrf.mxu0
    %v2470 = vadd.f32 0.0, %v2469
    %v2471 = vpop.f32.mrf.mxu0
    %v2472 = vadd.f32 0.0, %v2471
    %2473 = vmatprep.mubr.bf16.mxu0 0
    %2474 = vmatmul.mubr.bf16.gmra.mxu0 %v165
    %v2475 = vpop.f32.mrf.mxu0
    %v2476 = vadd.f32 0.0, %v2475
    %v2477 = vpop.f32.mrf.mxu0
    %v2478 = vadd.f32 0.0, %v2477
    %v2479 = vpop.f32.mrf.mxu0
    %v2480 = vadd.f32 0.0, %v2479
    %v2481 = vpop.f32.mrf.mxu0
    %v2482 = vadd.f32 0.0, %v2481
    %2483 = vmatprep.mubr.bf16.mxu0 0
    %2484 = vmatmul.mubr.bf16.gmra.mxu0 %v168
    %v2485 = vpop.f32.mrf.mxu0
    %v2486 = vadd.f32 0.0, %v2485
    %v2487 = vpop.f32.mrf.mxu0
    %v2488 = vadd.f32 0.0, %v2487
    %v2489 = vpop.f32.mrf.mxu0
    %v2490 = vadd.f32 0.0, %v2489
    %v2491 = vpop.f32.mrf.mxu0
    %v2492 = vadd.f32 0.0, %v2491
    %2493 = vmatprep.mubr.bf16.mxu0 0
    %2494 = vmatmul.mubr.bf16.gmra.mxu0 %v171
    %v2495 = vpop.f32.mrf.mxu0
    %v2496 = vadd.f32 0.0, %v2495
    %v2497 = vpop.f32.mrf.mxu0
    %v2498 = vadd.f32 0.0, %v2497
    %v2499 = vpop.f32.mrf.mxu0
    %v2500 = vadd.f32 0.0, %v2499
    %v2501 = vpop.f32.mrf.mxu0
    %v2502 = vadd.f32 0.0, %v2501
    %2503 = vdwg.mxu0
    %v2504 = vmax.f32 %v2426, 0.0
    %v2505 = vmax.f32 %v2428, 0.0
    %v2506 = vmax.f32 %v2430, 0.0
    %v2507 = vmax.f32 %v2432, 0.0
    %v2508 = vmax.f32 %v2436, 0.0
    %v2509 = vmax.f32 %v2438, 0.0
    %v2510 = vmax.f32 %v2440, 0.0
    %v2511 = vmax.f32 %v2442, 0.0
    %v2512 = vmax.f32 %v2446, 0.0
    %v2513 = vmax.f32 %v2448, 0.0
    %v2514 = vmax.f32 %v2450, 0.0
    %v2515 = vmax.f32 %v2452, 0.0
    %v2516 = vmax.f32 %v2456, 0.0
    %v2517 = vmax.f32 %v2458, 0.0
    %v2518 = vmax.f32 %v2460, 0.0
    %v2519 = vmax.f32 %v2462, 0.0
    %v2520 = vmax.f32 %v2466, 0.0
    %v2521 = vmax.f32 %v2468, 0.0
    %v2522 = vmax.f32 %v2470, 0.0
    %v2523 = vmax.f32 %v2472, 0.0
    %v2524 = vmax.f32 %v2476, 0.0
    %v2525 = vmax.f32 %v2478, 0.0
    %v2526 = vmax.f32 %v2480, 0.0
    %v2527 = vmax.f32 %v2482, 0.0
    %v2528 = vmax.f32 %v2486, 0.0
    %v2529 = vmax.f32 %v2488, 0.0
    %v2530 = vmax.f32 %v2490, 0.0
    %v2531 = vmax.f32 %v2492, 0.0
    %v2532 = vmax.f32 %v2496, 0.0
    %v2533 = vmax.f32 %v2498, 0.0
    %v2534 = vmax.f32 %v2500, 0.0
    %v2535 = vmax.f32 %v2502, 0.0
    %v2536 = vpack.c.bf16 %v2506, %v2504
    %v2537 = vpack.c.bf16 %v2507, %v2505
    %v2538 = vpack.c.bf16 %v2510, %v2508
    %v2539 = vpack.c.bf16 %v2511, %v2509
    %v2540 = vpack.c.bf16 %v2514, %v2512
    %v2541 = vpack.c.bf16 %v2515, %v2513
    %v2542 = vpack.c.bf16 %v2518, %v2516
    %v2543 = vpack.c.bf16 %v2519, %v2517
    %v2544 = vpack.c.bf16 %v2522, %v2520
    %v2545 = vpack.c.bf16 %v2523, %v2521
    %v2546 = vpack.c.bf16 %v2526, %v2524
    %v2547 = vpack.c.bf16 %v2527, %v2525
    %v2548 = vpack.c.bf16 %v2530, %v2528
    %v2549 = vpack.c.bf16 %v2531, %v2529
    %v2550 = vpack.c.bf16 %v2534, %v2532
    %v2551 = vpack.c.bf16 %v2535, %v2533
    %v2552 = vld [vmem:[#allocation5 + $0x280] sm:$0xf]
    %v2553 = vld [vmem:[#allocation5 + $0x284] sm:$0xf]
    %v2554 = vld [vmem:[#allocation5 + $0x288] sm:$0xf]
    %v2555 = vld [vmem:[#allocation5 + $0x28c] sm:$0xf]
    %v2556 = vld [vmem:[#allocation5 + $0x290] sm:$0xf]
    %v2557 = vld [vmem:[#allocation5 + $0x294] sm:$0xf]
    %v2558 = vld [vmem:[#allocation5 + $0x298] sm:$0xf]
    %v2559 = vld [vmem:[#allocation5 + $0x29c] sm:$0xf]
    %v2560 = vld [vmem:[#allocation5 + $0x2a0] sm:$0xf]
    %v2561 = vld [vmem:[#allocation5 + $0x2a4] sm:$0xf]
    %v2562 = vld [vmem:[#allocation5 + $0x2a8] sm:$0xf]
    %v2563 = vld [vmem:[#allocation5 + $0x2ac] sm:$0xf]
    %v2564 = vld [vmem:[#allocation5 + $0x2b0] sm:$0xf]
    %v2565 = vld [vmem:[#allocation5 + $0x2b4] sm:$0xf]
    %v2566 = vld [vmem:[#allocation5 + $0x2b8] sm:$0xf]
    %v2567 = vld [vmem:[#allocation5 + $0x2bc] sm:$0xf]
    %v2568 = vld [vmem:[#allocation5 + $0x2c0] sm:$0xf]
    %v2569 = vld [vmem:[#allocation5 + $0x2c4] sm:$0xf]
    %v2570 = vld [vmem:[#allocation5 + $0x2c8] sm:$0xf]
    %v2571 = vld [vmem:[#allocation5 + $0x2cc] sm:$0xf]
    %v2572 = vld [vmem:[#allocation5 + $0x2d0] sm:$0xf]
    %v2573 = vld [vmem:[#allocation5 + $0x2d4] sm:$0xf]
    %v2574 = vld [vmem:[#allocation5 + $0x2d8] sm:$0xf]
    %v2575 = vld [vmem:[#allocation5 + $0x2dc] sm:$0xf]
    %v2576 = vld [vmem:[#allocation5 + $0x2e0] sm:$0xf]
    %v2577 = vld [vmem:[#allocation5 + $0x2e4] sm:$0xf]
    %v2578 = vld [vmem:[#allocation5 + $0x2e8] sm:$0xf]
    %v2579 = vld [vmem:[#allocation5 + $0x2ec] sm:$0xf]
    %v2580 = vld [vmem:[#allocation5 + $0x2f0] sm:$0xf]
    %v2581 = vld [vmem:[#allocation5 + $0x2f4] sm:$0xf]
    %v2582 = vld [vmem:[#allocation5 + $0x2f8] sm:$0xf]
    %v2583 = vld [vmem:[#allocation5 + $0x2fc] sm:$0xf]
    %v2616 = vunpack.c.l.b16 %v2552
    %v2617 = vunpack.c.l.b16 %v2553
    %v2618 = vunpack.c.l.b16 %v2554
    %v2619 = vunpack.c.l.b16 %v2555
    %v2620 = vunpack.c.l.b16 %v2556
    %v2621 = vunpack.c.l.b16 %v2557
    %v2622 = vunpack.c.l.b16 %v2558
    %v2623 = vunpack.c.l.b16 %v2559
    %v2624 = vunpack.c.l.b16 %v2560
    %v2625 = vunpack.c.l.b16 %v2561
    %v2626 = vunpack.c.l.b16 %v2562
    %v2627 = vunpack.c.l.b16 %v2563
    %v2628 = vunpack.c.l.b16 %v2564
    %v2629 = vunpack.c.l.b16 %v2565
    %v2630 = vunpack.c.l.b16 %v2566
    %v2631 = vunpack.c.l.b16 %v2567
    %v2632 = vunpack.c.l.b16 %v2568
    %v2633 = vunpack.c.l.b16 %v2569
    %v2634 = vunpack.c.l.b16 %v2570
    %v2635 = vunpack.c.l.b16 %v2571
    %v2636 = vunpack.c.l.b16 %v2572
    %v2637 = vunpack.c.l.b16 %v2573
    %v2638 = vunpack.c.l.b16 %v2574
    %v2639 = vunpack.c.l.b16 %v2575
    %v2640 = vunpack.c.l.b16 %v2576
    %v2641 = vunpack.c.l.b16 %v2577
    %v2642 = vunpack.c.l.b16 %v2578
    %v2643 = vunpack.c.l.b16 %v2579
    %v2644 = vunpack.c.l.b16 %v2580
    %v2645 = vunpack.c.l.b16 %v2581
    %v2646 = vunpack.c.l.b16 %v2582
    %v2647 = vunpack.c.l.b16 %v2583
    %v2648 = vpack.c.b16 %v2617, %v2616
    %v2649 = vpack.c.b16 %v2619, %v2618
    %v2650 = vpack.c.b16 %v2621, %v2620
    %v2651 = vpack.c.b16 %v2623, %v2622
    %v2652 = vpack.c.b16 %v2625, %v2624
    %v2653 = vpack.c.b16 %v2627, %v2626
    %v2654 = vpack.c.b16 %v2629, %v2628
    %v2655 = vpack.c.b16 %v2631, %v2630
    %v2656 = vpack.c.b16 %v2633, %v2632
    %v2657 = vpack.c.b16 %v2635, %v2634
    %v2658 = vpack.c.b16 %v2637, %v2636
    %v2659 = vpack.c.b16 %v2639, %v2638
    %v2660 = vpack.c.b16 %v2641, %v2640
    %v2661 = vpack.c.b16 %v2643, %v2642
    %v2662 = vpack.c.b16 %v2645, %v2644
    %v2663 = vpack.c.b16 %v2647, %v2646
    %2680 = vmatprep.subr.bf16.mxu0 0
    %2681 = vmatpush1.bf16.msra.mxu0 %v2655
    %2682 = vmatprep.subr.bf16.mxu0 0
    %2683 = vmatpush1.bf16.msra.mxu0 %v2654
    %2684 = vmatprep.subr.bf16.mxu0 0
    %2685 = vmatpush1.bf16.msra.mxu0 %v2653
    %2686 = vmatprep.subr.bf16.mxu0 0
    %2687 = vmatpush1.bf16.msra.mxu0 %v2652
    %2688 = vmatprep.subr.bf16.mxu0 0
    %2689 = vmatpush1.bf16.msra.mxu0 %v2651
    %2690 = vmatprep.subr.bf16.mxu0 0
    %2691 = vmatpush1.bf16.msra.mxu0 %v2650
    %2692 = vmatprep.subr.bf16.mxu0 0
    %2693 = vmatpush1.bf16.msra.mxu0 %v2649
    %2694 = vmatprep.subr.bf16.mxu0 0
    %2695 = vmatpush1.bf16.msra.mxu0 %v2648
    %2696 = vmatprep.subr.bf16.mxu0 0
    %2697 = vmatpush2.bf16.msra.mxu0 %v2663
    %2698 = vmatprep.subr.bf16.mxu0 0
    %2699 = vmatpush2.bf16.msra.mxu0 %v2662
    %2700 = vmatprep.subr.bf16.mxu0 0
    %2701 = vmatpush2.bf16.msra.mxu0 %v2661
    %2702 = vmatprep.subr.bf16.mxu0 0
    %2703 = vmatpush2.bf16.msra.mxu0 %v2660
    %2704 = vmatprep.subr.bf16.mxu0 0
    %2705 = vmatpush2.bf16.msra.mxu0 %v2659
    %2706 = vmatprep.subr.bf16.mxu0 0
    %2707 = vmatpush2.bf16.msra.mxu0 %v2658
    %2708 = vmatprep.subr.bf16.mxu0 0
    %2709 = vmatpush2.bf16.msra.mxu0 %v2657
    %2710 = vmatprep.subr.bf16.mxu0 0
    %2711 = vmatpush2.bf16.msra.mxu0 %v2656
    %2712 = vmatprep.mubr.bf16.mxu0 %v2537
    %2713 = vmatmul.mubr.bf16.gmra.mxu0 %v2536
    %v2714 = vpop.f32.mrf.mxu0
    %v2715 = vadd.f32 0.0, %v2714
    %v2716 = vpop.f32.mrf.mxu0
    %v2717 = vpop.f32.mrf.mxu0
    %v2718 = vadd.f32 0.0, %v2717
    %v2719 = vpop.f32.mrf.mxu0
    %2720 = vmatprep.mubr.bf16.mxu0 %v2539
    %2721 = vmatmul.mubr.bf16.gmra.mxu0 %v2538
    %v2722 = vpop.f32.mrf.mxu0
    %v2723 = vadd.f32 0.0, %v2722
    %v2724 = vpop.f32.mrf.mxu0
    %v2725 = vpop.f32.mrf.mxu0
    %v2726 = vadd.f32 0.0, %v2725
    %v2727 = vpop.f32.mrf.mxu0
    %2728 = vmatprep.mubr.bf16.mxu0 %v2541
    %2729 = vmatmul.mubr.bf16.gmra.mxu0 %v2540
    %v2730 = vpop.f32.mrf.mxu0
    %v2731 = vadd.f32 0.0, %v2730
    %v2732 = vpop.f32.mrf.mxu0
    %v2733 = vpop.f32.mrf.mxu0
    %v2734 = vadd.f32 0.0, %v2733
    %v2735 = vpop.f32.mrf.mxu0
    %2736 = vmatprep.mubr.bf16.mxu0 %v2543
    %2737 = vmatmul.mubr.bf16.gmra.mxu0 %v2542
    %v2738 = vpop.f32.mrf.mxu0
    %v2739 = vadd.f32 0.0, %v2738
    %v2740 = vpop.f32.mrf.mxu0
    %v2741 = vpop.f32.mrf.mxu0
    %v2742 = vadd.f32 0.0, %v2741
    %v2743 = vpop.f32.mrf.mxu0
    %2744 = vmatprep.mubr.bf16.mxu0 %v2545
    %2745 = vmatmul.mubr.bf16.gmra.mxu0 %v2544
    %v2746 = vpop.f32.mrf.mxu0
    %v2747 = vadd.f32 0.0, %v2746
    %v2748 = vpop.f32.mrf.mxu0
    %v2749 = vpop.f32.mrf.mxu0
    %v2750 = vadd.f32 0.0, %v2749
    %v2751 = vpop.f32.mrf.mxu0
    %2752 = vmatprep.mubr.bf16.mxu0 %v2547
    %2753 = vmatmul.mubr.bf16.gmra.mxu0 %v2546
    %v2754 = vpop.f32.mrf.mxu0
    %v2755 = vadd.f32 0.0, %v2754
    %v2756 = vpop.f32.mrf.mxu0
    %v2757 = vpop.f32.mrf.mxu0
    %v2758 = vadd.f32 0.0, %v2757
    %v2759 = vpop.f32.mrf.mxu0
    %2760 = vmatprep.mubr.bf16.mxu0 %v2549
    %2761 = vmatmul.mubr.bf16.gmra.mxu0 %v2548
    %v2762 = vpop.f32.mrf.mxu0
    %v2763 = vadd.f32 0.0, %v2762
    %v2764 = vpop.f32.mrf.mxu0
    %v2765 = vpop.f32.mrf.mxu0
    %v2766 = vadd.f32 0.0, %v2765
    %v2767 = vpop.f32.mrf.mxu0
    %2768 = vmatprep.mubr.bf16.mxu0 %v2551
    %2769 = vmatmul.mubr.bf16.gmra.mxu0 %v2550
    %v2770 = vpop.f32.mrf.mxu0
    %v2771 = vadd.f32 0.0, %v2770
    %v2772 = vpop.f32.mrf.mxu0
    %v2773 = vpop.f32.mrf.mxu0
    %v2774 = vadd.f32 0.0, %v2773
    %v2775 = vpop.f32.mrf.mxu0
    %2776 = vdwg.mxu0
    %v2777 = vadd.f32 %v2327, %v2715
    %v2778 = vadd.f32 %v2328, %v2718
    %v2779 = vadd.f32 %v2329, %v2723
    %v2780 = vadd.f32 %v2330, %v2726
    %v2781 = vadd.f32 %v2331, %v2731
    %v2782 = vadd.f32 %v2332, %v2734
    %v2783 = vadd.f32 %v2333, %v2739
    %v2784 = vadd.f32 %v2334, %v2742
    %v2785 = vadd.f32 %v2335, %v2747
    %v2786 = vadd.f32 %v2336, %v2750
    %v2787 = vadd.f32 %v2337, %v2755
    %v2788 = vadd.f32 %v2338, %v2758
    %v2789 = vadd.f32 %v2339, %v2763
    %v2790 = vadd.f32 %v2340, %v2766
    %v2791 = vadd.f32 %v2341, %v2771
    %v2792 = vadd.f32 %v2342, %v2774
    %v2793 = vld [vmem:[#allocation2 + $0x30] sm:$0xff]
    %v2794 = vld [vmem:[#allocation2 + $0x68] sm:$0xff]
    %v2795 = vld [vmem:[#allocation2 + $0xa0] sm:$0xff]
    %v2796 = vld [vmem:[#allocation2 + $0xd8] sm:$0xff]
    %v2797 = vld [vmem:[#allocation2 + $0x110] sm:$0xff]
    %v2798 = vld [vmem:[#allocation2 + $0x148] sm:$0xff]
    %v2799 = vld [vmem:[#allocation2 + $0x180] sm:$0xff]
    %v2800 = vld [vmem:[#allocation2 + $0x1b8] sm:$0xff]
    %v2809 = vunpack.c.l.b16 %v2793
    %v2810 = vunpack.c.h.b16 %v2793
    %v2811 = vunpack.c.l.b16 %v2794
    %v2812 = vunpack.c.h.b16 %v2794
    %v2813 = vunpack.c.l.b16 %v2795
    %v2814 = vunpack.c.h.b16 %v2795
    %v2815 = vunpack.c.l.b16 %v2796
    %v2816 = vunpack.c.h.b16 %v2796
    %v2817 = vunpack.c.l.b16 %v2797
    %v2818 = vunpack.c.h.b16 %v2797
    %v2819 = vunpack.c.l.b16 %v2798
    %v2820 = vunpack.c.h.b16 %v2798
    %v2821 = vunpack.c.l.b16 %v2799
    %v2822 = vunpack.c.h.b16 %v2799
    %v2823 = vunpack.c.l.b16 %v2800
    %v2824 = vunpack.c.h.b16 %v2800
    %v2825 = vpack.c.b16 %v2811, %v2809
    %v2826 = vpack.c.b16 %v2812, %v2810
    %v2827 = vpack.c.b16 %v2815, %v2813
    %v2828 = vpack.c.b16 %v2816, %v2814
    %v2829 = vpack.c.b16 %v2819, %v2817
    %v2830 = vpack.c.b16 %v2820, %v2818
    %v2831 = vpack.c.b16 %v2823, %v2821
    %v2832 = vpack.c.b16 %v2824, %v2822
    %2841 = vmatprep.subr.bf16.mxu0 0
    %2842 = vmatpush1.bf16.msra.mxu0 0
    %2843 = vmatprep.subr.bf16.mxu0 0
    %2844 = vmatpush1.bf16.msra.mxu0 0
    %2845 = vmatprep.subr.bf16.mxu0 0
    %2846 = vmatpush1.bf16.msra.mxu0 0
    %2847 = vmatprep.subr.bf16.mxu0 0
    %2848 = vmatpush1.bf16.msra.mxu0 0
    %2849 = vmatprep.subr.bf16.mxu0 %v2832
    %2850 = vmatpush1.bf16.msra.mxu0 %v2831
    %2851 = vmatprep.subr.bf16.mxu0 %v2830
    %2852 = vmatpush1.bf16.msra.mxu0 %v2829
    %2853 = vmatprep.subr.bf16.mxu0 %v2828
    %2854 = vmatpush1.bf16.msra.mxu0 %v2827
    %2855 = vmatprep.subr.bf16.mxu0 %v2826
    %2856 = vmatpush1.bf16.msra.mxu0 %v2825
    %2857 = vmatprep.subr.bf16.mxu0 0
    %2858 = vmatpush2.bf16.msra.mxu0 0
    %2859 = vmatprep.subr.bf16.mxu0 0
    %2860 = vmatpush2.bf16.msra.mxu0 0
    %2861 = vmatprep.subr.bf16.mxu0 0
    %2862 = vmatpush2.bf16.msra.mxu0 0
    %2863 = vmatprep.subr.bf16.mxu0 0
    %2864 = vmatpush2.bf16.msra.mxu0 0
    %2865 = vmatprep.subr.bf16.mxu0 0
    %2866 = vmatpush2.bf16.msra.mxu0 0
    %2867 = vmatprep.subr.bf16.mxu0 0
    %2868 = vmatpush2.bf16.msra.mxu0 0
    %2869 = vmatprep.subr.bf16.mxu0 0
    %2870 = vmatpush2.bf16.msra.mxu0 0
    %2871 = vmatprep.subr.bf16.mxu0 0
    %2872 = vmatpush2.bf16.msra.mxu0 0
    %2873 = vmatprep.mubr.bf16.mxu0 0
    %2874 = vmatmul.mubr.bf16.gmra.mxu0 %v150
    %v2875 = vpop.f32.mrf.mxu0
    %v2876 = vadd.f32 0.0, %v2875
    %v2877 = vpop.f32.mrf.mxu0
    %v2878 = vadd.f32 0.0, %v2877
    %v2879 = vpop.f32.mrf.mxu0
    %v2880 = vadd.f32 0.0, %v2879
    %v2881 = vpop.f32.mrf.mxu0
    %v2882 = vadd.f32 0.0, %v2881
    %2883 = vmatprep.mubr.bf16.mxu0 0
    %2884 = vmatmul.mubr.bf16.gmra.mxu0 %v153
    %v2885 = vpop.f32.mrf.mxu0
    %v2886 = vadd.f32 0.0, %v2885
    %v2887 = vpop.f32.mrf.mxu0
    %v2888 = vadd.f32 0.0, %v2887
    %v2889 = vpop.f32.mrf.mxu0
    %v2890 = vadd.f32 0.0, %v2889
    %v2891 = vpop.f32.mrf.mxu0
    %v2892 = vadd.f32 0.0, %v2891
    %2893 = vmatprep.mubr.bf16.mxu0 0
    %2894 = vmatmul.mubr.bf16.gmra.mxu0 %v156
    %v2895 = vpop.f32.mrf.mxu0
    %v2896 = vadd.f32 0.0, %v2895
    %v2897 = vpop.f32.mrf.mxu0
    %v2898 = vadd.f32 0.0, %v2897
    %v2899 = vpop.f32.mrf.mxu0
    %v2900 = vadd.f32 0.0, %v2899
    %v2901 = vpop.f32.mrf.mxu0
    %v2902 = vadd.f32 0.0, %v2901
    %2903 = vmatprep.mubr.bf16.mxu0 0
    %2904 = vmatmul.mubr.bf16.gmra.mxu0 %v159
    %v2905 = vpop.f32.mrf.mxu0
    %v2906 = vadd.f32 0.0, %v2905
    %v2907 = vpop.f32.mrf.mxu0
    %v2908 = vadd.f32 0.0, %v2907
    %v2909 = vpop.f32.mrf.mxu0
    %v2910 = vadd.f32 0.0, %v2909
    %v2911 = vpop.f32.mrf.mxu0
    %v2912 = vadd.f32 0.0, %v2911
    %2913 = vmatprep.mubr.bf16.mxu0 0
    %2914 = vmatmul.mubr.bf16.gmra.mxu0 %v162
    %v2915 = vpop.f32.mrf.mxu0
    %v2916 = vadd.f32 0.0, %v2915
    %v2917 = vpop.f32.mrf.mxu0
    %v2918 = vadd.f32 0.0, %v2917
    %v2919 = vpop.f32.mrf.mxu0
    %v2920 = vadd.f32 0.0, %v2919
    %v2921 = vpop.f32.mrf.mxu0
    %v2922 = vadd.f32 0.0, %v2921
    %2923 = vmatprep.mubr.bf16.mxu0 0
    %2924 = vmatmul.mubr.bf16.gmra.mxu0 %v165
    %v2925 = vpop.f32.mrf.mxu0
    %v2926 = vadd.f32 0.0, %v2925
    %v2927 = vpop.f32.mrf.mxu0
    %v2928 = vadd.f32 0.0, %v2927
    %v2929 = vpop.f32.mrf.mxu0
    %v2930 = vadd.f32 0.0, %v2929
    %v2931 = vpop.f32.mrf.mxu0
    %v2932 = vadd.f32 0.0, %v2931
    %2933 = vmatprep.mubr.bf16.mxu0 0
    %2934 = vmatmul.mubr.bf16.gmra.mxu0 %v168
    %v2935 = vpop.f32.mrf.mxu0
    %v2936 = vadd.f32 0.0, %v2935
    %v2937 = vpop.f32.mrf.mxu0
    %v2938 = vadd.f32 0.0, %v2937
    %v2939 = vpop.f32.mrf.mxu0
    %v2940 = vadd.f32 0.0, %v2939
    %v2941 = vpop.f32.mrf.mxu0
    %v2942 = vadd.f32 0.0, %v2941
    %2943 = vmatprep.mubr.bf16.mxu0 0
    %2944 = vmatmul.mubr.bf16.gmra.mxu0 %v171
    %v2945 = vpop.f32.mrf.mxu0
    %v2946 = vadd.f32 0.0, %v2945
    %v2947 = vpop.f32.mrf.mxu0
    %v2948 = vadd.f32 0.0, %v2947
    %v2949 = vpop.f32.mrf.mxu0
    %v2950 = vadd.f32 0.0, %v2949
    %v2951 = vpop.f32.mrf.mxu0
    %v2952 = vadd.f32 0.0, %v2951
    %2953 = vdwg.mxu0
    %v2954 = vmax.f32 %v2876, 0.0
    %v2955 = vmax.f32 %v2878, 0.0
    %v2956 = vmax.f32 %v2880, 0.0
    %v2957 = vmax.f32 %v2882, 0.0
    %v2958 = vmax.f32 %v2886, 0.0
    %v2959 = vmax.f32 %v2888, 0.0
    %v2960 = vmax.f32 %v2890, 0.0
    %v2961 = vmax.f32 %v2892, 0.0
    %v2962 = vmax.f32 %v2896, 0.0
    %v2963 = vmax.f32 %v2898, 0.0
    %v2964 = vmax.f32 %v2900, 0.0
    %v2965 = vmax.f32 %v2902, 0.0
    %v2966 = vmax.f32 %v2906, 0.0
    %v2967 = vmax.f32 %v2908, 0.0
    %v2968 = vmax.f32 %v2910, 0.0
    %v2969 = vmax.f32 %v2912, 0.0
    %v2970 = vmax.f32 %v2916, 0.0
    %v2971 = vmax.f32 %v2918, 0.0
    %v2972 = vmax.f32 %v2920, 0.0
    %v2973 = vmax.f32 %v2922, 0.0
    %v2974 = vmax.f32 %v2926, 0.0
    %v2975 = vmax.f32 %v2928, 0.0
    %v2976 = vmax.f32 %v2930, 0.0
    %v2977 = vmax.f32 %v2932, 0.0
    %v2978 = vmax.f32 %v2936, 0.0
    %v2979 = vmax.f32 %v2938, 0.0
    %v2980 = vmax.f32 %v2940, 0.0
    %v2981 = vmax.f32 %v2942, 0.0
    %v2982 = vmax.f32 %v2946, 0.0
    %v2983 = vmax.f32 %v2948, 0.0
    %v2984 = vmax.f32 %v2950, 0.0
    %v2985 = vmax.f32 %v2952, 0.0
    %v2986 = vpack.c.bf16 %v2956, %v2954
    %v2987 = vpack.c.bf16 %v2957, %v2955
    %v2988 = vpack.c.bf16 %v2960, %v2958
    %v2989 = vpack.c.bf16 %v2961, %v2959
    %v2990 = vpack.c.bf16 %v2964, %v2962
    %v2991 = vpack.c.bf16 %v2965, %v2963
    %v2992 = vpack.c.bf16 %v2968, %v2966
    %v2993 = vpack.c.bf16 %v2969, %v2967
    %v2994 = vpack.c.bf16 %v2972, %v2970
    %v2995 = vpack.c.bf16 %v2973, %v2971
    %v2996 = vpack.c.bf16 %v2976, %v2974
    %v2997 = vpack.c.bf16 %v2977, %v2975
    %v2998 = vpack.c.bf16 %v2980, %v2978
    %v2999 = vpack.c.bf16 %v2981, %v2979
    %v3000 = vpack.c.bf16 %v2984, %v2982
    %v3001 = vpack.c.bf16 %v2985, %v2983
    %v3002 = vld [vmem:[#allocation5 + $0x300] sm:$0xf]
    %v3003 = vld [vmem:[#allocation5 + $0x304] sm:$0xf]
    %v3004 = vld [vmem:[#allocation5 + $0x308] sm:$0xf]
    %v3005 = vld [vmem:[#allocation5 + $0x30c] sm:$0xf]
    %v3006 = vld [vmem:[#allocation5 + $0x310] sm:$0xf]
    %v3007 = vld [vmem:[#allocation5 + $0x314] sm:$0xf]
    %v3008 = vld [vmem:[#allocation5 + $0x318] sm:$0xf]
    %v3009 = vld [vmem:[#allocation5 + $0x31c] sm:$0xf]
    %v3010 = vld [vmem:[#allocation5 + $0x320] sm:$0xf]
    %v3011 = vld [vmem:[#allocation5 + $0x324] sm:$0xf]
    %v3012 = vld [vmem:[#allocation5 + $0x328] sm:$0xf]
    %v3013 = vld [vmem:[#allocation5 + $0x32c] sm:$0xf]
    %v3014 = vld [vmem:[#allocation5 + $0x330] sm:$0xf]
    %v3015 = vld [vmem:[#allocation5 + $0x334] sm:$0xf]
    %v3016 = vld [vmem:[#allocation5 + $0x338] sm:$0xf]
    %v3017 = vld [vmem:[#allocation5 + $0x33c] sm:$0xf]
    %v3018 = vld [vmem:[#allocation5 + $0x340] sm:$0xf]
    %v3019 = vld [vmem:[#allocation5 + $0x344] sm:$0xf]
    %v3020 = vld [vmem:[#allocation5 + $0x348] sm:$0xf]
    %v3021 = vld [vmem:[#allocation5 + $0x34c] sm:$0xf]
    %v3022 = vld [vmem:[#allocation5 + $0x350] sm:$0xf]
    %v3023 = vld [vmem:[#allocation5 + $0x354] sm:$0xf]
    %v3024 = vld [vmem:[#allocation5 + $0x358] sm:$0xf]
    %v3025 = vld [vmem:[#allocation5 + $0x35c] sm:$0xf]
    %v3026 = vld [vmem:[#allocation5 + $0x360] sm:$0xf]
    %v3027 = vld [vmem:[#allocation5 + $0x364] sm:$0xf]
    %v3028 = vld [vmem:[#allocation5 + $0x368] sm:$0xf]
    %v3029 = vld [vmem:[#allocation5 + $0x36c] sm:$0xf]
    %v3030 = vld [vmem:[#allocation5 + $0x370] sm:$0xf]
    %v3031 = vld [vmem:[#allocation5 + $0x374] sm:$0xf]
    %v3032 = vld [vmem:[#allocation5 + $0x378] sm:$0xf]
    %v3033 = vld [vmem:[#allocation5 + $0x37c] sm:$0xf]
    %v3066 = vunpack.c.l.b16 %v3002
    %v3067 = vunpack.c.l.b16 %v3003
    %v3068 = vunpack.c.l.b16 %v3004
    %v3069 = vunpack.c.l.b16 %v3005
    %v3070 = vunpack.c.l.b16 %v3006
    %v3071 = vunpack.c.l.b16 %v3007
    %v3072 = vunpack.c.l.b16 %v3008
    %v3073 = vunpack.c.l.b16 %v3009
    %v3074 = vunpack.c.l.b16 %v3010
    %v3075 = vunpack.c.l.b16 %v3011
    %v3076 = vunpack.c.l.b16 %v3012
    %v3077 = vunpack.c.l.b16 %v3013
    %v3078 = vunpack.c.l.b16 %v3014
    %v3079 = vunpack.c.l.b16 %v3015
    %v3080 = vunpack.c.l.b16 %v3016
    %v3081 = vunpack.c.l.b16 %v3017
    %v3082 = vunpack.c.l.b16 %v3018
    %v3083 = vunpack.c.l.b16 %v3019
    %v3084 = vunpack.c.l.b16 %v3020
    %v3085 = vunpack.c.l.b16 %v3021
    %v3086 = vunpack.c.l.b16 %v3022
    %v3087 = vunpack.c.l.b16 %v3023
    %v3088 = vunpack.c.l.b16 %v3024
    %v3089 = vunpack.c.l.b16 %v3025
    %v3090 = vunpack.c.l.b16 %v3026
    %v3091 = vunpack.c.l.b16 %v3027
    %v3092 = vunpack.c.l.b16 %v3028
    %v3093 = vunpack.c.l.b16 %v3029
    %v3094 = vunpack.c.l.b16 %v3030
    %v3095 = vunpack.c.l.b16 %v3031
    %v3096 = vunpack.c.l.b16 %v3032
    %v3097 = vunpack.c.l.b16 %v3033
    %v3098 = vpack.c.b16 %v3067, %v3066
    %v3099 = vpack.c.b16 %v3069, %v3068
    %v3100 = vpack.c.b16 %v3071, %v3070
    %v3101 = vpack.c.b16 %v3073, %v3072
    %v3102 = vpack.c.b16 %v3075, %v3074
    %v3103 = vpack.c.b16 %v3077, %v3076
    %v3104 = vpack.c.b16 %v3079, %v3078
    %v3105 = vpack.c.b16 %v3081, %v3080
    %v3106 = vpack.c.b16 %v3083, %v3082
    %v3107 = vpack.c.b16 %v3085, %v3084
    %v3108 = vpack.c.b16 %v3087, %v3086
    %v3109 = vpack.c.b16 %v3089, %v3088
    %v3110 = vpack.c.b16 %v3091, %v3090
    %v3111 = vpack.c.b16 %v3093, %v3092
    %v3112 = vpack.c.b16 %v3095, %v3094
    %v3113 = vpack.c.b16 %v3097, %v3096
    %3130 = vmatprep.subr.bf16.mxu0 0
    %3131 = vmatpush1.bf16.msra.mxu0 %v3105
    %3132 = vmatprep.subr.bf16.mxu0 0
    %3133 = vmatpush1.bf16.msra.mxu0 %v3104
    %3134 = vmatprep.subr.bf16.mxu0 0
    %3135 = vmatpush1.bf16.msra.mxu0 %v3103
    %3136 = vmatprep.subr.bf16.mxu0 0
    %3137 = vmatpush1.bf16.msra.mxu0 %v3102
    %3138 = vmatprep.subr.bf16.mxu0 0
    %3139 = vmatpush1.bf16.msra.mxu0 %v3101
    %3140 = vmatprep.subr.bf16.mxu0 0
    %3141 = vmatpush1.bf16.msra.mxu0 %v3100
    %3142 = vmatprep.subr.bf16.mxu0 0
    %3143 = vmatpush1.bf16.msra.mxu0 %v3099
    %3144 = vmatprep.subr.bf16.mxu0 0
    %3145 = vmatpush1.bf16.msra.mxu0 %v3098
    %3146 = vmatprep.subr.bf16.mxu0 0
    %3147 = vmatpush2.bf16.msra.mxu0 %v3113
    %3148 = vmatprep.subr.bf16.mxu0 0
    %3149 = vmatpush2.bf16.msra.mxu0 %v3112
    %3150 = vmatprep.subr.bf16.mxu0 0
    %3151 = vmatpush2.bf16.msra.mxu0 %v3111
    %3152 = vmatprep.subr.bf16.mxu0 0
    %3153 = vmatpush2.bf16.msra.mxu0 %v3110
    %3154 = vmatprep.subr.bf16.mxu0 0
    %3155 = vmatpush2.bf16.msra.mxu0 %v3109
    %3156 = vmatprep.subr.bf16.mxu0 0
    %3157 = vmatpush2.bf16.msra.mxu0 %v3108
    %3158 = vmatprep.subr.bf16.mxu0 0
    %3159 = vmatpush2.bf16.msra.mxu0 %v3107
    %3160 = vmatprep.subr.bf16.mxu0 0
    %3161 = vmatpush2.bf16.msra.mxu0 %v3106
    %3162 = vmatprep.mubr.bf16.mxu0 %v2987
    %3163 = vmatmul.mubr.bf16.gmra.mxu0 %v2986
    %v3164 = vpop.f32.mrf.mxu0
    %v3165 = vadd.f32 0.0, %v3164
    %v3166 = vpop.f32.mrf.mxu0
    %v3167 = vpop.f32.mrf.mxu0
    %v3168 = vadd.f32 0.0, %v3167
    %v3169 = vpop.f32.mrf.mxu0
    %3170 = vmatprep.mubr.bf16.mxu0 %v2989
    %3171 = vmatmul.mubr.bf16.gmra.mxu0 %v2988
    %v3172 = vpop.f32.mrf.mxu0
    %v3173 = vadd.f32 0.0, %v3172
    %v3174 = vpop.f32.mrf.mxu0
    %v3175 = vpop.f32.mrf.mxu0
    %v3176 = vadd.f32 0.0, %v3175
    %v3177 = vpop.f32.mrf.mxu0
    %3178 = vmatprep.mubr.bf16.mxu0 %v2991
    %3179 = vmatmul.mubr.bf16.gmra.mxu0 %v2990
    %v3180 = vpop.f32.mrf.mxu0
    %v3181 = vadd.f32 0.0, %v3180
    %v3182 = vpop.f32.mrf.mxu0
    %v3183 = vpop.f32.mrf.mxu0
    %v3184 = vadd.f32 0.0, %v3183
    %v3185 = vpop.f32.mrf.mxu0
    %3186 = vmatprep.mubr.bf16.mxu0 %v2993
    %3187 = vmatmul.mubr.bf16.gmra.mxu0 %v2992
    %v3188 = vpop.f32.mrf.mxu0
    %v3189 = vadd.f32 0.0, %v3188
    %v3190 = vpop.f32.mrf.mxu0
    %v3191 = vpop.f32.mrf.mxu0
    %v3192 = vadd.f32 0.0, %v3191
    %v3193 = vpop.f32.mrf.mxu0
    %3194 = vmatprep.mubr.bf16.mxu0 %v2995
    %3195 = vmatmul.mubr.bf16.gmra.mxu0 %v2994
    %v3196 = vpop.f32.mrf.mxu0
    %v3197 = vadd.f32 0.0, %v3196
    %v3198 = vpop.f32.mrf.mxu0
    %v3199 = vpop.f32.mrf.mxu0
    %v3200 = vadd.f32 0.0, %v3199
    %v3201 = vpop.f32.mrf.mxu0
    %3202 = vmatprep.mubr.bf16.mxu0 %v2997
    %3203 = vmatmul.mubr.bf16.gmra.mxu0 %v2996
    %v3204 = vpop.f32.mrf.mxu0
    %v3205 = vadd.f32 0.0, %v3204
    %v3206 = vpop.f32.mrf.mxu0
    %v3207 = vpop.f32.mrf.mxu0
    %v3208 = vadd.f32 0.0, %v3207
    %v3209 = vpop.f32.mrf.mxu0
    %3210 = vmatprep.mubr.bf16.mxu0 %v2999
    %3211 = vmatmul.mubr.bf16.gmra.mxu0 %v2998
    %v3212 = vpop.f32.mrf.mxu0
    %v3213 = vadd.f32 0.0, %v3212
    %v3214 = vpop.f32.mrf.mxu0
    %v3215 = vpop.f32.mrf.mxu0
    %v3216 = vadd.f32 0.0, %v3215
    %v3217 = vpop.f32.mrf.mxu0
    %3218 = vmatprep.mubr.bf16.mxu0 %v3001
    %3219 = vmatmul.mubr.bf16.gmra.mxu0 %v3000
    %v3220 = vpop.f32.mrf.mxu0
    %v3221 = vadd.f32 0.0, %v3220
    %v3222 = vpop.f32.mrf.mxu0
    %v3223 = vpop.f32.mrf.mxu0
    %v3224 = vadd.f32 0.0, %v3223
    %v3225 = vpop.f32.mrf.mxu0
    %3226 = vdwg.mxu0
    %v3227 = vadd.f32 %v2777, %v3165
    %v3228 = vadd.f32 %v2778, %v3168
    %v3229 = vadd.f32 %v2779, %v3173
    %v3230 = vadd.f32 %v2780, %v3176
    %v3231 = vadd.f32 %v2781, %v3181
    %v3232 = vadd.f32 %v2782, %v3184
    %v3233 = vadd.f32 %v2783, %v3189
    %v3234 = vadd.f32 %v2784, %v3192
    %v3235 = vadd.f32 %v2785, %v3197
    %v3236 = vadd.f32 %v2786, %v3200
    %v3237 = vadd.f32 %v2787, %v3205
    %v3238 = vadd.f32 %v2788, %v3208
    %v3239 = vadd.f32 %v2789, %v3213
    %v3240 = vadd.f32 %v2790, %v3216
    %v3241 = vadd.f32 %v2791, %v3221
    %v3242 = vadd.f32 %v2792, %v3224
    %3243 = vst [vmem:[#allocation7] sm:$0xff] %v3227
    %3244 = vst [vmem:[#allocation7 + $0x8] sm:$0xff] %v3228
    %3245 = vst [vmem:[#allocation7 + $0x10] sm:$0xff] %v3229
    %3246 = vst [vmem:[#allocation7 + $0x18] sm:$0xff] %v3230
    %3247 = vst [vmem:[#allocation7 + $0x20] sm:$0xff] %v3231
    %3248 = vst [vmem:[#allocation7 + $0x28] sm:$0xff] %v3232
    %3249 = vst [vmem:[#allocation7 + $0x30] sm:$0xff] %v3233
    %3250 = vst [vmem:[#allocation7 + $0x38] sm:$0xff] %v3234
    %3251 = vst [vmem:[#allocation7 + $0x40] sm:$0xff] %v3235
    %3252 = vst [vmem:[#allocation7 + $0x48] sm:$0xff] %v3236
    %3253 = vst [vmem:[#allocation7 + $0x50] sm:$0xff] %v3237
    %3254 = vst [vmem:[#allocation7 + $0x58] sm:$0xff] %v3238
    %3255 = vst [vmem:[#allocation7 + $0x60] sm:$0xff] %v3239
    %3256 = vst [vmem:[#allocation7 + $0x68] sm:$0xff] %v3240
    %3257 = vst [vmem:[#allocation7 + $0x70] sm:$0xff] %v3241
    %3258 = vst [vmem:[#allocation7 + $0x78] sm:$0xff] %v3242
    // Predicated region
    $region22: #{tpu_custom_call.1} parent=1 // pred_check
      _
    $region23: #{tpu_custom_call.1} parent=1 // pred_check_branch
      %3260 = sbr.rel (0) target = $region25
    $region24: #{tpu_custom_call.1} parent=1 // pred_region
      %s3262 = ssub.s32 2048, 2048
      %3263 = vsyncadd [#allocation4], %s3262
      %s3264 = sshll.u32 [#allocation7], 4
      %s3265 = int_to_ptr.vmem [resolvable:$true] %s3264
      %3270 = dma.vmem_to_hbm [thread:$0]  %s3265, 2048, %s3, [#allocation4], 128, 128, 8
    $region25: #{tpu_custom_call.1} parent=1 // pred_fallthru
      _
    // Predicated region
    $region26: #{tpu_custom_call.1} parent=1 // pred_check
      _
    $region27: #{tpu_custom_call.1} parent=1 // pred_check_branch
      %3272 = sbr.rel (0) target = $region29
    $region28: #{tpu_custom_call.1} parent=1 // pred_region
      %3273 = dma.done [#allocation4], 2048
    $region29: #{tpu_custom_call.1} parent=1 // pred_fallthru
      _
    %3274 = vsyncpa [#allocation3], 1
    %3275 = vsyncpa [#allocation6], 1
    %3276 = vsyncpa [#allocation4], 1

</llo_original>
